<compile_context>
chip_gen: v5e
topology: v5e:2x2
jax: 0.10.0
libtpu: 0.0.40
codegen_flags: <defaults>
</compile_context>

<pallas_src>
import jax
import jax.numpy as jnp
from jax.experimental import pallas as pl
from jax.experimental.pallas import tpu as pltpu

INPUT_SIZE = 768     # nn.Linear(768, 512)
HIDDEN = 512
NUM_CLASSES = 2
LOGIT_PAD = 128      # lane-dense padded class dimension (unmasked stores)
MAX_TILE_B = 512     # big-batch tile cap; VMEM footprint stays ~a few MB
NEG_BIG = -1.0e30    # padded-logit bias: acts as -inf for the softmax, stays finite


def ext_arch_head_kernel(x_ref, w1_ref, b1_ref, w2_ref, b2_ref, o_ref):
    # x: (tile_b, 768) f32   w1: (768, 512) bf16   b1: (1, 512) f32
    # w2: (512, 128) bf16 (zero-padded past col 2)
    # b2: (1, 128) f32 (real biases in lanes 0..1, -1e30 in padded lanes)
    # o:  (tile_b, 128) bf16 (valid log-probs in lanes 0..1)

    # In-kernel cast of the activations to bf16 (hides under the MXU).
    x = x_ref[...].astype(jnp.bfloat16)

    # fc1: bf16 operands on the MXU, f32 accumulate; bias + ReLU fused.
    h = jnp.dot(x, w1_ref[...], preferred_element_type=jnp.float32) + b1_ref[...]
    h = jnp.maximum(h, 0.0)

    # Dropout(p=0.1): identity in eval/inference mode.
    # TODO(synk): training-mode stochastic dropout (pltpu.prng_seed/prng_random_bits) not emitted.

    # fc2: single bf16 MXU pass.  Padded w2 columns are zero and padded b2 lanes
    # are -1e30, so the padded logits are already "masked" -- no iota/where needed.
    logits = jnp.dot(h.astype(jnp.bfloat16), w2_ref[...],
                     preferred_element_type=jnp.float32) + b2_ref[...]

    # Numerically stable LogSoftmax over the class lanes (exp/log -> EUP, sum -> XLU).
    m = jnp.max(logits, axis=-1, keepdims=True)
    z = logits - m
    lse = jnp.log(jnp.sum(jnp.exp(z), axis=-1, keepdims=True))
    o_ref[...] = (z - lse).astype(o_ref.dtype)


def _choose_tile_b(B):
    """Adaptive batch tile: full batch for tiny B, >=2 tiles (v7x megacore)
    for mid-size B, capped at MAX_TILE_B rows for large B."""
    if B < 32:
        return B                          # single block equal to the full batch dim
    half = -(-B // 2)                     # ceil(B / 2)  -> at least 2 grid tiles
    tile = -(-half // 16) * 16            # round up to a multiple of 16 (sublane-friendly)
    return min(tile, MAX_TILE_B)


def prepare_params(w1, b1, w2, b2):
    """One-time parameter prep (hoisted out of the per-call path).

    w1: (768, 512), b1: (1, 512), w2: (512, 2), b2: (1, 2)  ->  kernel-ready arrays.
    """
    w1_bf16 = w1.astype(jnp.bfloat16)
    b1_f32 = b1.reshape(1, HIDDEN).astype(jnp.float32)
    w2_pad = jnp.pad(w2.astype(jnp.bfloat16),
                     ((0, 0), (0, LOGIT_PAD - NUM_CLASSES)))
    b2_pad = jnp.full((1, LOGIT_PAD), NEG_BIG, jnp.float32)
    b2_pad = b2_pad.at[:, :NUM_CLASSES].set(b2.reshape(1, NUM_CLASSES).astype(jnp.float32))
    return w1_bf16, b1_f32, w2_pad, b2_pad


def ext_arch_head(cls_hs, w1_bf16, b1_f32, w2_pad, b2_pad):
    """cls_hs: (B, 768) f32 pooled [CLS] representation -> (B, 2) f32 log-probs."""
    B = cls_hs.shape[0]
    tile_b = _choose_tile_b(B)
    n_tiles = pl.cdiv(B, tile_b)

    cost = pl.CostEstimate(
        flops=2 * B * INPUT_SIZE * HIDDEN + 2 * B * HIDDEN * LOGIT_PAD,
        transcendentals=B * LOGIT_PAD,
        bytes_accessed=(B * INPUT_SIZE * 4            # x (f32 read)
                        + w1_bf16.size * 2            # w1 (bf16)
                        + b1_f32.size * 4
                        + w2_pad.size * 2             # w2 (bf16)
                        + b2_pad.size * 4
                        + B * LOGIT_PAD * 2),         # out (bf16 write)
    )

    out_pad = pl.pallas_call(
        ext_arch_head_kernel,
        out_shape=jax.ShapeDtypeStruct((B, LOGIT_PAD), jnp.bfloat16),
        grid=(n_tiles,),
        in_specs=[
            pl.BlockSpec((tile_b, INPUT_SIZE), lambda i: (i, 0)),   # x: batch-tiled
            pl.BlockSpec((INPUT_SIZE, HIDDEN), lambda i: (0, 0)),   # w1: resident
            pl.BlockSpec((1, HIDDEN), lambda i: (0, 0)),            # b1: resident
            pl.BlockSpec((HIDDEN, LOGIT_PAD), lambda i: (0, 0)),    # w2 (padded): resident
            pl.BlockSpec((1, LOGIT_PAD), lambda i: (0, 0)),         # b2 (padded/masked): resident
        ],
        out_specs=pl.BlockSpec((tile_b, LOGIT_PAD), lambda i: (i, 0)),
        compiler_params=pltpu.CompilerParams(
            dimension_semantics=("parallel",),   # megacore sharding across batch tiles
        ),
        cost_estimate=cost,
    )(cls_hs.astype(jnp.float32), w1_bf16, b1_f32, w2_pad, b2_pad)

    # Slice the lane-dense slab back to the real (B, 2) log-probs (padded lanes /
    # out-of-bounds rows are discarded here).
    return out_pad[:B, :NUM_CLASSES].astype(jnp.float32)


def init_params(key):
    """Deterministic synthetic init matching nn.Linear shapes.

    torch fc1.weight: (512, 768) -> stored transposed as (768, 512)
    torch fc2.weight: (2, 512)   -> stored transposed as (512, 2)
    """
    k1, k2, k3, k4 = jax.random.split(key, 4)
    bound1 = 1.0 / jnp.sqrt(INPUT_SIZE)
    bound2 = 1.0 / jnp.sqrt(HIDDEN)
    w1 = jax.random.uniform(k1, (INPUT_SIZE, HIDDEN), jnp.float32, -bound1, bound1)
    b1 = jax.random.uniform(k2, (1, HIDDEN), jnp.float32, -bound1, bound1)
    w2 = jax.random.uniform(k3, (HIDDEN, NUM_CLASSES), jnp.float32, -bound2, bound2)
    b2 = jax.random.uniform(k4, (1, NUM_CLASSES), jnp.float32, -bound2, bound2)
    return w1, b1, w2, b2


def reference_head(cls_hs, w1, b1, w2, b2):
    h = jnp.maximum(cls_hs @ w1 + b1, 0.0)
    logits = h @ w2 + b2
    return jax.nn.log_softmax(logits, axis=1)


if __name__ == "__main__":
    # TODO(synk): the pretrained transformer (self.pretrained_model) producing
    # cls_hs is out of scope; we feed a synthetic pooled [CLS] representation.
    key = jax.random.PRNGKey(0)
    kx, kp = jax.random.split(key)

    B = 2
    cls_hs = jax.random.normal(kx, (B, INPUT_SIZE), jnp.float32)
    w1, b1, w2, b2 = init_params(kp)

    # One-time parameter prep (bf16 cast + class-lane padding + bias mask).
    w1_bf16, b1_f32, w2_pad, b2_pad = prepare_params(w1, b1, w2, b2)

    out = ext_arch_head(cls_hs, w1_bf16, b1_f32, w2_pad, b2_pad)
    out = jax.block_until_ready(out)

    ref = reference_head(cls_hs, w1, b1, w2, b2)
    assert out.shape == (B, NUM_CLASSES)
    # bf16 fc1/fc2 operands and bf16 output -> relaxed tolerance vs the f32 reference.
    assert jnp.allclose(out, ref, atol=3e-2, rtol=3e-2), "mismatch vs reference"
    # Log-softmax sanity: rows sum to 1 in prob space.
    assert jnp.allclose(jnp.sum(jnp.exp(out), axis=1), 1.0, atol=3e-2)

    print("KERNEL_OK")
</pallas_src>

<mosaic_0001>
module attributes {stable_mosaic.version = 11 : i64} {
  func.func @ext_arch_head_kernel(%arg0: i32, %arg1: memref<2x768xf32, #tpu.memory_space<vmem>>, %arg2: memref<768x512xbf16, #tpu.memory_space<vmem>>, %arg3: memref<1x512xf32, #tpu.memory_space<vmem>>, %arg4: memref<512x128xbf16, #tpu.memory_space<vmem>>, %arg5: memref<1x128xf32, #tpu.memory_space<vmem>>, %arg6: memref<2x128xbf16, #tpu.memory_space<vmem>>) attributes {dimension_semantics = [#tpu.dimension_semantics<parallel>], iteration_bounds = array<i64: 1>, scalar_prefetch = 0 : i64, scratch_operands = 0 : i64, tpu.core_type = #tpu.core_type<tc>, window_params = [{transform_indices = @transform_0, window_bounds = array<i64: 2, 768>}, {pipeline_mode = #tpu.pipeline_mode<synchronous>, transform_indices = @transform_1, window_bounds = array<i64: 768, 512>}, {pipeline_mode = #tpu.pipeline_mode<synchronous>, transform_indices = @transform_2, window_bounds = array<i64: 1, 512>}, {pipeline_mode = #tpu.pipeline_mode<synchronous>, transform_indices = @transform_3, window_bounds = array<i64: 512, 128>}, {pipeline_mode = #tpu.pipeline_mode<synchronous>, transform_indices = @transform_4, window_bounds = array<i64: 1, 128>}, {transform_indices = @transform_5, window_bounds = array<i64: 2, 128>}]} {
    %c0 = arith.constant 0 : index
    %c0_0 = arith.constant 0 : index
    %0 = vector.load %arg1[%c0, %c0_0] : memref<2x768xf32, #tpu.memory_space<vmem>>, vector<2x768xf32>
    %1 = arith.truncf %0 : vector<2x768xf32> to vector<2x768xbf16>
    %c0_1 = arith.constant 0 : index
    %c0_2 = arith.constant 0 : index
    %2 = vector.load %arg2[%c0_1, %c0_2] : memref<768x512xbf16, #tpu.memory_space<vmem>>, vector<768x512xbf16>
    %cst = arith.constant dense<0.000000e+00> : vector<2x512xf32>
    %3 = tpu.matmul %1, %2, %cst {dimension_numbers = #tpu.dot_dimension_numbers<[1], [0], [0], [1], [0, 0, 1, 1], [], []>} : vector<2x768xbf16>, vector<768x512xbf16>, vector<2x512xf32> -> vector<2x512xf32>
    %c0_3 = arith.constant 0 : index
    %c0_4 = arith.constant 0 : index
    %4 = vector.load %arg3[%c0_3, %c0_4] : memref<1x512xf32, #tpu.memory_space<vmem>>, vector<1x512xf32>
    %5 = vector.broadcast %4 : vector<1x512xf32> to vector<2x512xf32>
    %6 = arith.addf %3, %5 : vector<2x512xf32>
    %cst_5 = arith.constant 0.000000e+00 : f32
    %7 = vector.broadcast %cst_5 : f32 to vector<2x512xf32>
    %8 = arith.maximumf %6, %7 : vector<2x512xf32>
    %9 = arith.truncf %8 : vector<2x512xf32> to vector<2x512xbf16>
    %c0_6 = arith.constant 0 : index
    %c0_7 = arith.constant 0 : index
    %10 = vector.load %arg4[%c0_6, %c0_7] : memref<512x128xbf16, #tpu.memory_space<vmem>>, vector<512x128xbf16>
    %cst_8 = arith.constant dense<0.000000e+00> : vector<2x128xf32>
    %11 = tpu.matmul %9, %10, %cst_8 {dimension_numbers = #tpu.dot_dimension_numbers<[1], [0], [0], [1], [0, 0, 1, 1], [], []>} : vector<2x512xbf16>, vector<512x128xbf16>, vector<2x128xf32> -> vector<2x128xf32>
    %c0_9 = arith.constant 0 : index
    %c0_10 = arith.constant 0 : index
    %12 = vector.load %arg5[%c0_9, %c0_10] : memref<1x128xf32, #tpu.memory_space<vmem>>, vector<1x128xf32>
    %13 = vector.broadcast %12 : vector<1x128xf32> to vector<2x128xf32>
    %14 = arith.addf %11, %13 : vector<2x128xf32>
    %cst_11 = arith.constant dense<0xFF800000> : vector<2xf32>
    %15 = vector.multi_reduction <maximumf>, %14, %cst_11 [1] : vector<2x128xf32> to vector<2xf32>
    %16 = vector.shape_cast %15 : vector<2xf32> to vector<2x1xf32>
    %17 = vector.broadcast %16 : vector<2x1xf32> to vector<2x128xf32>
    %18 = arith.subf %14, %17 : vector<2x128xf32>
    %19 = math.exp %18 : vector<2x128xf32>
    %cst_12 = arith.constant dense<0.000000e+00> : vector<2xf32>
    %20 = vector.multi_reduction <add>, %19, %cst_12 [1] : vector<2x128xf32> to vector<2xf32>
    %21 = vector.shape_cast %20 : vector<2xf32> to vector<2x1xf32>
    %22 = math.log %21 : vector<2x1xf32>
    %23 = vector.broadcast %22 : vector<2x1xf32> to vector<2x128xf32>
    %24 = arith.subf %18, %23 : vector<2x128xf32>
    %25 = arith.truncf %24 : vector<2x128xf32> to vector<2x128xbf16>
    %c0_13 = arith.constant 0 : index
    %c0_14 = arith.constant 0 : index
    %26 = vector.load %arg6[%c0_13, %c0_14] : memref<2x128xbf16, #tpu.memory_space<vmem>>, vector<2x128xbf16>
    tpu.vector_store %arg6[%c0_13, %c0_14], %25 {strides = array<i32>} : memref<2x128xbf16, #tpu.memory_space<vmem>>, vector<2x128xbf16>,
    return
  }
  func.func @transform_0(%arg0: i32) -> (i32, i32) {
    %c0_i32 = arith.constant 0 : i32
    %c0_i32_0 = arith.constant 0 : i32
    return %arg0, %c0_i32 : i32, i32
  }
  func.func @transform_1(%arg0: i32) -> (i32, i32) {
    %c0_i32 = arith.constant 0 : i32
    %c0_i32_0 = arith.constant 0 : i32
    %c0_i32_1 = arith.constant 0 : i32
    return %c0_i32, %c0_i32_0 : i32, i32
  }
  func.func @transform_2(%arg0: i32) -> (i32, i32) {
    %c0_i32 = arith.constant 0 : i32
    %c0_i32_0 = arith.constant 0 : i32
    %c0_i32_1 = arith.constant 0 : i32
    return %c0_i32, %c0_i32_0 : i32, i32
  }
  func.func @transform_3(%arg0: i32) -> (i32, i32) {
    %c0_i32 = arith.constant 0 : i32
    %c0_i32_0 = arith.constant 0 : i32
    %c0_i32_1 = arith.constant 0 : i32
    return %c0_i32, %c0_i32_0 : i32, i32
  }
  func.func @transform_4(%arg0: i32) -> (i32, i32) {
    %c0_i32 = arith.constant 0 : i32
    %c0_i32_0 = arith.constant 0 : i32
    %c0_i32_1 = arith.constant 0 : i32
    return %c0_i32, %c0_i32_0 : i32, i32
  }
  func.func @transform_5(%arg0: i32) -> (i32, i32) {
    %c0_i32 = arith.constant 0 : i32
    %c0_i32_0 = arith.constant 0 : i32
    return %arg0, %c0_i32 : i32, i32
  }
}

</mosaic_0001>

<llo_original>
// kernel: tpu_custom_call.1
$region0: #{tpu_custom_call.1}
  #allocation0 [shape = 'u32[]', space=smem, size = 0x4, offset = 0x4, fixed_abs, tag = 'smem constant byte address 0x4 - core index']
  #allocation1 [shape = 'u32[72,128]{1,0:T(1,128)}', space=vmem, size = 0x9000, scoped, tag = 'internal scratch']
  %s0 = inlined_call_operand.hbm [shape: f32[2,768], index: 0, kind: input, shape index: {}]
  %s1 = inlined_call_operand.hbm [shape: bf16[768,512], index: 1, kind: input, shape index: {}]
  %s2 = inlined_call_operand.hbm [shape: f32[1,512], index: 2, kind: input, shape index: {}]
  %s3 = inlined_call_operand.hbm [shape: bf16[512,128], index: 3, kind: input, shape index: {}]
  %s4 = inlined_call_operand.vmem [shape: f32[1,128], index: 4, kind: input, shape index: {}]
  %s5 = inlined_call_operand.hbm [shape: bf16[2,128], index: 5, kind: output, shape index: {}]
  %s6 = sld [smem:[#allocation0]]
  $region46: #{tpu_custom_call.1} parent=0
    _
  %s8 = ssub.s32 1, %s6
  %s9 = scalar_select 0, %s8, %s6
  $region1: #{tpu_custom_call.1} parent=0
    #allocation2 [shape = 'u8[6144]{0}', space=vmem, size = 0x1800, scoped, tag = 'input window, operand 0, single buffered']
    #allocation3 [shape = 's32[1]{0}', space=sflag, size = 0x4, scoped, tag = 'scoped memory for tpu_custom_call.1']
    #allocation4 [shape = 's32[1]{0}', space=sflag, size = 0x4, scoped, tag = 'scoped memory for tpu_custom_call.1']
    #allocation5 [shape = 'u8[786432]{0}', space=vmem, size = 0xc0000, scoped, tag = 'input window, operand 1, single buffered']
    #allocation6 [shape = 's32[1]{0}', space=sflag, size = 0x4, scoped, tag = 'scoped memory for tpu_custom_call.1']
    #allocation7 [shape = 'u8[2048]{0}', space=vmem, size = 0x800, scoped, tag = 'input window, operand 2, single buffered']
    #allocation8 [shape = 'u8[131072]{0}', space=vmem, size = 0x20000, scoped, tag = 'input window, operand 3, single buffered']
    #allocation9 [shape = 's32[1]{0}', space=sflag, size = 0x4, scoped, tag = 'scoped memory for tpu_custom_call.1']
    #allocation10 [shape = 'u8[512]{0}', space=vmem, size = 0x400, scoped, tag = 'output window, operand 0, single buffered']
    %10 = vsyncpa [#allocation3], 0
    %11 = vsyncpa [#allocation6], 0
    %12 = vsyncpa [#allocation9], 0
    %13 = vsyncpa [#allocation4], 0
    // Predicated region
    $region2: #{tpu_custom_call.1} parent=1 // pred_check
      _
    $region3: #{tpu_custom_call.1} parent=1 // pred_check_branch
      %15 = sbr.rel (0) target = $region5
    $region4: #{tpu_custom_call.1} parent=1 // pred_region
      %17 = vsyncadd [#allocation3], 0
      %s19 = sshll.u32 %s0, 4
      %s20 = int_to_ptr.hbm [resolvable:$true] %s19
      %s21 = sshll.u32 [#allocation2], 4
      %s22 = int_to_ptr.vmem [resolvable:$true] %s21
      %24 = dma.hbm_to_vmem [thread:$0]  %s20, 192, %s22, [#allocation3]
    $region5: #{tpu_custom_call.1} parent=1 // pred_fallthru
      _
    // Predicated region
    $region6: #{tpu_custom_call.1} parent=1 // pred_check
      _
    $region7: #{tpu_custom_call.1} parent=1 // pred_check_branch
      %26 = sbr.rel (0) target = $region9
    $region8: #{tpu_custom_call.1} parent=1 // pred_region
      %28 = vsyncadd [#allocation6], 0
      %s29 = sshll.u32 %s1, 4
      %s30 = int_to_ptr.hbm [resolvable:$true] %s29
      %s31 = sshll.u32 [#allocation5], 4
      %s32 = int_to_ptr.vmem [resolvable:$true] %s31
      %37 = dma.hbm_to_vmem [thread:$0]  %s30, 24576, %s32, [#allocation6], 256, 256, 16
    $region9: #{tpu_custom_call.1} parent=1 // pred_fallthru
      _
    // Predicated region
    $region10: #{tpu_custom_call.1} parent=1 // pred_check
      _
    $region11: #{tpu_custom_call.1} parent=1 // pred_check_branch
      %39 = sbr.rel (0) target = $region13
    $region12: #{tpu_custom_call.1} parent=1 // pred_region
      %41 = vsyncadd [#allocation6], 0
      %s43 = sshll.u32 %s2, 4
      %s44 = int_to_ptr.hbm [resolvable:$true] %s43
      %s45 = sshll.u32 [#allocation7], 4
      %s46 = int_to_ptr.vmem [resolvable:$true] %s45
      %48 = dma.hbm_to_vmem [thread:$0]  %s44, 64, %s46, [#allocation6]
    $region13: #{tpu_custom_call.1} parent=1 // pred_fallthru
      _
    // Predicated region
    $region14: #{tpu_custom_call.1} parent=1 // pred_check
      _
    $region15: #{tpu_custom_call.1} parent=1 // pred_check_branch
      %50 = sbr.rel (0) target = $region17
    $region16: #{tpu_custom_call.1} parent=1 // pred_region
      %52 = vsyncadd [#allocation9], 0
      %s53 = sshll.u32 %s3, 4
      %s54 = int_to_ptr.hbm [resolvable:$true] %s53
      %s55 = sshll.u32 [#allocation8], 4
      %s56 = int_to_ptr.vmem [resolvable:$true] %s55
      %61 = dma.hbm_to_vmem [thread:$0]  %s54, 4096, %s56, [#allocation9], 64, 64, 4
    $region17: #{tpu_custom_call.1} parent=1 // pred_fallthru
      _
    // Predicated region
    $region18: #{tpu_custom_call.1} parent=1 // pred_check
      _
    $region19: #{tpu_custom_call.1} parent=1 // pred_check_branch
      %63 = sbr.rel (0) target = $region21
    $region20: #{tpu_custom_call.1} parent=1 // pred_region
      _
    $region21: #{tpu_custom_call.1} parent=1 // pred_fallthru
      _
    // Predicated region
    $region22: #{tpu_custom_call.1} parent=1 // pred_check
      _
    $region23: #{tpu_custom_call.1} parent=1 // pred_check_branch
      %65 = sbr.rel (0) target = $region25
    $region24: #{tpu_custom_call.1} parent=1 // pred_region
      %67 = dma.done [#allocation3], 192
    $region25: #{tpu_custom_call.1} parent=1 // pred_fallthru
      _
    // Predicated region
    $region26: #{tpu_custom_call.1} parent=1 // pred_check
      _
    $region27: #{tpu_custom_call.1} parent=1 // pred_check_branch
      %69 = sbr.rel (0) target = $region29
    $region28: #{tpu_custom_call.1} parent=1 // pred_region
      %71 = dma.done [#allocation6], 24576
    $region29: #{tpu_custom_call.1} parent=1 // pred_fallthru
      _
    // Predicated region
    $region30: #{tpu_custom_call.1} parent=1 // pred_check
      _
    $region31: #{tpu_custom_call.1} parent=1 // pred_check_branch
      %73 = sbr.rel (0) target = $region33
    $region32: #{tpu_custom_call.1} parent=1 // pred_region
      %75 = dma.done [#allocation6], 64
    $region33: #{tpu_custom_call.1} parent=1 // pred_fallthru
      _
    // Predicated region
    $region34: #{tpu_custom_call.1} parent=1 // pred_check
      _
    $region35: #{tpu_custom_call.1} parent=1 // pred_check_branch
      %77 = sbr.rel (0) target = $region37
    $region36: #{tpu_custom_call.1} parent=1 // pred_region
      %79 = dma.done [#allocation9], 4096
    $region37: #{tpu_custom_call.1} parent=1 // pred_fallthru
      _
    %v80 = vld [vmem:[#allocation2] sm:$0xff]
    %v81 = vld [vmem:[#allocation2 + $0x8] sm:$0xf]
    %84 = vst [vmem:[#allocation1] ss:$4 sm:$0xff] %v80
    %s85 = scalar_lea.vmem [#allocation1], 32
    %86 = vst [vmem:[%s85] ss:$4 sm:$0xff] %v81
    %v87 = vld.sshfl [vmem:[#allocation1] sm:$0xff pattern:$0x73625140]
    %v88 = vld.sshfl [vmem:[#allocation1 + $0x8] sm:$0xff pattern:$0x73625140]
    %v89 = vld.sshfl [vmem:[#allocation1 + $0x10] sm:$0xff pattern:$0x73625140]
    %v90 = vld.sshfl [vmem:[#allocation1 + $0x18] sm:$0xff pattern:$0x73625140]
    %v91 = vld.sshfl [vmem:[#allocation1 + $0x20] sm:$0xff pattern:$0x73625140]
    %v92 = vld.sshfl [vmem:[#allocation1 + $0x28] sm:$0xff pattern:$0x73625140]
    %v99 = vpack.c.bf16 %v87, %v87
    %v100 = vpack.c.bf16 %v88, %v88
    %v101 = vpack.c.bf16 %v89, %v89
    %v102 = vpack.c.bf16 %v90, %v90
    %v103 = vpack.c.bf16 %v91, %v91
    %v104 = vpack.c.bf16 %v92, %v92
    %v105 = vld [vmem:[#allocation5] sm:$0xff]
    %v106 = vld [vmem:[#allocation5 + $0x8] sm:$0xff]
    %v107 = vld [vmem:[#allocation5 + $0x10] sm:$0xff]
    %v108 = vld [vmem:[#allocation5 + $0x18] sm:$0xff]
    %v109 = vld [vmem:[#allocation5 + $0x20] sm:$0xff]
    %v110 = vld [vmem:[#allocation5 + $0x28] sm:$0xff]
    %v111 = vld [vmem:[#allocation5 + $0x30] sm:$0xff]
    %v112 = vld [vmem:[#allocation5 + $0x38] sm:$0xff]
    %v113 = vld [vmem:[#allocation5 + $0x40] sm:$0xff]
    %v114 = vld [vmem:[#allocation5 + $0x48] sm:$0xff]
    %v115 = vld [vmem:[#allocation5 + $0x50] sm:$0xff]
    %v116 = vld [vmem:[#allocation5 + $0x58] sm:$0xff]
    %v117 = vld [vmem:[#allocation5 + $0x60] sm:$0xff]
    %v118 = vld [vmem:[#allocation5 + $0x68] sm:$0xff]
    %v119 = vld [vmem:[#allocation5 + $0x70] sm:$0xff]
    %v120 = vld [vmem:[#allocation5 + $0x78] sm:$0xff]
    %v121 = vld [vmem:[#allocation5 + $0x80] sm:$0xff]
    %v122 = vld [vmem:[#allocation5 + $0x88] sm:$0xff]
    %v123 = vld [vmem:[#allocation5 + $0x90] sm:$0xff]
    %v124 = vld [vmem:[#allocation5 + $0x98] sm:$0xff]
    %v125 = vld [vmem:[#allocation5 + $0xa0] sm:$0xff]
    %v126 = vld [vmem:[#allocation5 + $0xa8] sm:$0xff]
    %v127 = vld [vmem:[#allocation5 + $0xb0] sm:$0xff]
    %v128 = vld [vmem:[#allocation5 + $0xb8] sm:$0xff]
    %v129 = vld [vmem:[#allocation5 + $0xc0] sm:$0xff]
    %v130 = vld [vmem:[#allocation5 + $0xc8] sm:$0xff]
    %v131 = vld [vmem:[#allocation5 + $0xd0] sm:$0xff]
    %v132 = vld [vmem:[#allocation5 + $0xd8] sm:$0xff]
    %v133 = vld [vmem:[#allocation5 + $0xe0] sm:$0xff]
    %v134 = vld [vmem:[#allocation5 + $0xe8] sm:$0xff]
    %v135 = vld [vmem:[#allocation5 + $0xf0] sm:$0xff]
    %v136 = vld [vmem:[#allocation5 + $0xf8] sm:$0xff]
    %v137 = vld [vmem:[#allocation5 + $0x100] sm:$0xff]
    %v138 = vld [vmem:[#allocation5 + $0x108] sm:$0xff]
    %v139 = vld [vmem:[#allocation5 + $0x110] sm:$0xff]
    %v140 = vld [vmem:[#allocation5 + $0x118] sm:$0xff]
    %v141 = vld [vmem:[#allocation5 + $0x120] sm:$0xff]
    %v142 = vld [vmem:[#allocation5 + $0x128] sm:$0xff]
    %v143 = vld [vmem:[#allocation5 + $0x130] sm:$0xff]
    %v144 = vld [vmem:[#allocation5 + $0x138] sm:$0xff]
    %v145 = vld [vmem:[#allocation5 + $0x140] sm:$0xff]
    %v146 = vld [vmem:[#allocation5 + $0x148] sm:$0xff]
    %v147 = vld [vmem:[#allocation5 + $0x150] sm:$0xff]
    %v148 = vld [vmem:[#allocation5 + $0x158] sm:$0xff]
    %v149 = vld [vmem:[#allocation5 + $0x160] sm:$0xff]
    %v150 = vld [vmem:[#allocation5 + $0x168] sm:$0xff]
    %v151 = vld [vmem:[#allocation5 + $0x170] sm:$0xff]
    %v152 = vld [vmem:[#allocation5 + $0x178] sm:$0xff]
    %v153 = vld [vmem:[#allocation5 + $0x180] sm:$0xff]
    %v154 = vld [vmem:[#allocation5 + $0x188] sm:$0xff]
    %v155 = vld [vmem:[#allocation5 + $0x190] sm:$0xff]
    %v156 = vld [vmem:[#allocation5 + $0x198] sm:$0xff]
    %v157 = vld [vmem:[#allocation5 + $0x1a0] sm:$0xff]
    %v158 = vld [vmem:[#allocation5 + $0x1a8] sm:$0xff]
    %v159 = vld [vmem:[#allocation5 + $0x1b0] sm:$0xff]
    %v160 = vld [vmem:[#allocation5 + $0x1b8] sm:$0xff]
    %v161 = vld [vmem:[#allocation5 + $0x1c0] sm:$0xff]
    %v162 = vld [vmem:[#allocation5 + $0x1c8] sm:$0xff]
    %v163 = vld [vmem:[#allocation5 + $0x1d0] sm:$0xff]
    %v164 = vld [vmem:[#allocation5 + $0x1d8] sm:$0xff]
    %v165 = vld [vmem:[#allocation5 + $0x1e0] sm:$0xff]
    %v166 = vld [vmem:[#allocation5 + $0x1e8] sm:$0xff]
    %v167 = vld [vmem:[#allocation5 + $0x1f0] sm:$0xff]
    %v168 = vld [vmem:[#allocation5 + $0x1f8] sm:$0xff]
    %v169 = vld [vmem:[#allocation5 + $0x200] sm:$0xff]
    %v170 = vld [vmem:[#allocation5 + $0x208] sm:$0xff]
    %v171 = vld [vmem:[#allocation5 + $0x210] sm:$0xff]
    %v172 = vld [vmem:[#allocation5 + $0x218] sm:$0xff]
    %v173 = vld [vmem:[#allocation5 + $0x220] sm:$0xff]
    %v174 = vld [vmem:[#allocation5 + $0x228] sm:$0xff]
    %v175 = vld [vmem:[#allocation5 + $0x230] sm:$0xff]
    %v176 = vld [vmem:[#allocation5 + $0x238] sm:$0xff]
    %v177 = vld [vmem:[#allocation5 + $0x240] sm:$0xff]
    %v178 = vld [vmem:[#allocation5 + $0x248] sm:$0xff]
    %v179 = vld [vmem:[#allocation5 + $0x250] sm:$0xff]
    %v180 = vld [vmem:[#allocation5 + $0x258] sm:$0xff]
    %v181 = vld [vmem:[#allocation5 + $0x260] sm:$0xff]
    %v182 = vld [vmem:[#allocation5 + $0x268] sm:$0xff]
    %v183 = vld [vmem:[#allocation5 + $0x270] sm:$0xff]
    %v184 = vld [vmem:[#allocation5 + $0x278] sm:$0xff]
    %v185 = vld [vmem:[#allocation5 + $0x280] sm:$0xff]
    %v186 = vld [vmem:[#allocation5 + $0x288] sm:$0xff]
    %v187 = vld [vmem:[#allocation5 + $0x290] sm:$0xff]
    %v188 = vld [vmem:[#allocation5 + $0x298] sm:$0xff]
    %v189 = vld [vmem:[#allocation5 + $0x2a0] sm:$0xff]
    %v190 = vld [vmem:[#allocation5 + $0x2a8] sm:$0xff]
    %v191 = vld [vmem:[#allocation5 + $0x2b0] sm:$0xff]
    %v192 = vld [vmem:[#allocation5 + $0x2b8] sm:$0xff]
    %v193 = vld [vmem:[#allocation5 + $0x2c0] sm:$0xff]
    %v194 = vld [vmem:[#allocation5 + $0x2c8] sm:$0xff]
    %v195 = vld [vmem:[#allocation5 + $0x2d0] sm:$0xff]
    %v196 = vld [vmem:[#allocation5 + $0x2d8] sm:$0xff]
    %v197 = vld [vmem:[#allocation5 + $0x2e0] sm:$0xff]
    %v198 = vld [vmem:[#allocation5 + $0x2e8] sm:$0xff]
    %v199 = vld [vmem:[#allocation5 + $0x2f0] sm:$0xff]
    %v200 = vld [vmem:[#allocation5 + $0x2f8] sm:$0xff]
    %v201 = vld [vmem:[#allocation5 + $0x300] sm:$0xff]
    %v202 = vld [vmem:[#allocation5 + $0x308] sm:$0xff]
    %v203 = vld [vmem:[#allocation5 + $0x310] sm:$0xff]
    %v204 = vld [vmem:[#allocation5 + $0x318] sm:$0xff]
    %v205 = vld [vmem:[#allocation5 + $0x320] sm:$0xff]
    %v206 = vld [vmem:[#allocation5 + $0x328] sm:$0xff]
    %v207 = vld [vmem:[#allocation5 + $0x330] sm:$0xff]
    %v208 = vld [vmem:[#allocation5 + $0x338] sm:$0xff]
    %v209 = vld [vmem:[#allocation5 + $0x340] sm:$0xff]
    %v210 = vld [vmem:[#allocation5 + $0x348] sm:$0xff]
    %v211 = vld [vmem:[#allocation5 + $0x350] sm:$0xff]
    %v212 = vld [vmem:[#allocation5 + $0x358] sm:$0xff]
    %v213 = vld [vmem:[#allocation5 + $0x360] sm:$0xff]
    %v214 = vld [vmem:[#allocation5 + $0x368] sm:$0xff]
    %v215 = vld [vmem:[#allocation5 + $0x370] sm:$0xff]
    %v216 = vld [vmem:[#allocation5 + $0x378] sm:$0xff]
    %v217 = vld [vmem:[#allocation5 + $0x380] sm:$0xff]
    %v218 = vld [vmem:[#allocation5 + $0x388] sm:$0xff]
    %v219 = vld [vmem:[#allocation5 + $0x390] sm:$0xff]
    %v220 = vld [vmem:[#allocation5 + $0x398] sm:$0xff]
    %v221 = vld [vmem:[#allocation5 + $0x3a0] sm:$0xff]
    %v222 = vld [vmem:[#allocation5 + $0x3a8] sm:$0xff]
    %v223 = vld [vmem:[#allocation5 + $0x3b0] sm:$0xff]
    %v224 = vld [vmem:[#allocation5 + $0x3b8] sm:$0xff]
    %v225 = vld [vmem:[#allocation5 + $0x3c0] sm:$0xff]
    %v226 = vld [vmem:[#allocation5 + $0x3c8] sm:$0xff]
    %v227 = vld [vmem:[#allocation5 + $0x3d0] sm:$0xff]
    %v228 = vld [vmem:[#allocation5 + $0x3d8] sm:$0xff]
    %v229 = vld [vmem:[#allocation5 + $0x3e0] sm:$0xff]
    %v230 = vld [vmem:[#allocation5 + $0x3e8] sm:$0xff]
    %v231 = vld [vmem:[#allocation5 + $0x3f0] sm:$0xff]
    %v232 = vld [vmem:[#allocation5 + $0x3f8] sm:$0xff]
    %v233 = vld [vmem:[#allocation5 + $0x400] sm:$0xff]
    %v234 = vld [vmem:[#allocation5 + $0x408] sm:$0xff]
    %v235 = vld [vmem:[#allocation5 + $0x410] sm:$0xff]
    %v236 = vld [vmem:[#allocation5 + $0x418] sm:$0xff]
    %v237 = vld [vmem:[#allocation5 + $0x420] sm:$0xff]
    %v238 = vld [vmem:[#allocation5 + $0x428] sm:$0xff]
    %v239 = vld [vmem:[#allocation5 + $0x430] sm:$0xff]
    %v240 = vld [vmem:[#allocation5 + $0x438] sm:$0xff]
    %v241 = vld [vmem:[#allocation5 + $0x440] sm:$0xff]
    %v242 = vld [vmem:[#allocation5 + $0x448] sm:$0xff]
    %v243 = vld [vmem:[#allocation5 + $0x450] sm:$0xff]
    %v244 = vld [vmem:[#allocation5 + $0x458] sm:$0xff]
    %v245 = vld [vmem:[#allocation5 + $0x460] sm:$0xff]
    %v246 = vld [vmem:[#allocation5 + $0x468] sm:$0xff]
    %v247 = vld [vmem:[#allocation5 + $0x470] sm:$0xff]
    %v248 = vld [vmem:[#allocation5 + $0x478] sm:$0xff]
    %v249 = vld [vmem:[#allocation5 + $0x480] sm:$0xff]
    %v250 = vld [vmem:[#allocation5 + $0x488] sm:$0xff]
    %v251 = vld [vmem:[#allocation5 + $0x490] sm:$0xff]
    %v252 = vld [vmem:[#allocation5 + $0x498] sm:$0xff]
    %v253 = vld [vmem:[#allocation5 + $0x4a0] sm:$0xff]
    %v254 = vld [vmem:[#allocation5 + $0x4a8] sm:$0xff]
    %v255 = vld [vmem:[#allocation5 + $0x4b0] sm:$0xff]
    %v256 = vld [vmem:[#allocation5 + $0x4b8] sm:$0xff]
    %v257 = vld [vmem:[#allocation5 + $0x4c0] sm:$0xff]
    %v258 = vld [vmem:[#allocation5 + $0x4c8] sm:$0xff]
    %v259 = vld [vmem:[#allocation5 + $0x4d0] sm:$0xff]
    %v260 = vld [vmem:[#allocation5 + $0x4d8] sm:$0xff]
    %v261 = vld [vmem:[#allocation5 + $0x4e0] sm:$0xff]
    %v262 = vld [vmem:[#allocation5 + $0x4e8] sm:$0xff]
    %v263 = vld [vmem:[#allocation5 + $0x4f0] sm:$0xff]
    %v264 = vld [vmem:[#allocation5 + $0x4f8] sm:$0xff]
    %v265 = vld [vmem:[#allocation5 + $0x500] sm:$0xff]
    %v266 = vld [vmem:[#allocation5 + $0x508] sm:$0xff]
    %v267 = vld [vmem:[#allocation5 + $0x510] sm:$0xff]
    %v268 = vld [vmem:[#allocation5 + $0x518] sm:$0xff]
    %v269 = vld [vmem:[#allocation5 + $0x520] sm:$0xff]
    %v270 = vld [vmem:[#allocation5 + $0x528] sm:$0xff]
    %v271 = vld [vmem:[#allocation5 + $0x530] sm:$0xff]
    %v272 = vld [vmem:[#allocation5 + $0x538] sm:$0xff]
    %v273 = vld [vmem:[#allocation5 + $0x540] sm:$0xff]
    %v274 = vld [vmem:[#allocation5 + $0x548] sm:$0xff]
    %v275 = vld [vmem:[#allocation5 + $0x550] sm:$0xff]
    %v276 = vld [vmem:[#allocation5 + $0x558] sm:$0xff]
    %v277 = vld [vmem:[#allocation5 + $0x560] sm:$0xff]
    %v278 = vld [vmem:[#allocation5 + $0x568] sm:$0xff]
    %v279 = vld [vmem:[#allocation5 + $0x570] sm:$0xff]
    %v280 = vld [vmem:[#allocation5 + $0x578] sm:$0xff]
    %v281 = vld [vmem:[#allocation5 + $0x580] sm:$0xff]
    %v282 = vld [vmem:[#allocation5 + $0x588] sm:$0xff]
    %v283 = vld [vmem:[#allocation5 + $0x590] sm:$0xff]
    %v284 = vld [vmem:[#allocation5 + $0x598] sm:$0xff]
    %v285 = vld [vmem:[#allocation5 + $0x5a0] sm:$0xff]
    %v286 = vld [vmem:[#allocation5 + $0x5a8] sm:$0xff]
    %v287 = vld [vmem:[#allocation5 + $0x5b0] sm:$0xff]
    %v288 = vld [vmem:[#allocation5 + $0x5b8] sm:$0xff]
    %v289 = vld [vmem:[#allocation5 + $0x5c0] sm:$0xff]
    %v290 = vld [vmem:[#allocation5 + $0x5c8] sm:$0xff]
    %v291 = vld [vmem:[#allocation5 + $0x5d0] sm:$0xff]
    %v292 = vld [vmem:[#allocation5 + $0x5d8] sm:$0xff]
    %v293 = vld [vmem:[#allocation5 + $0x5e0] sm:$0xff]
    %v294 = vld [vmem:[#allocation5 + $0x5e8] sm:$0xff]
    %v295 = vld [vmem:[#allocation5 + $0x5f0] sm:$0xff]
    %v296 = vld [vmem:[#allocation5 + $0x5f8] sm:$0xff]
    %v297 = vld [vmem:[#allocation7] sm:$0xf]
    %v299 = vperm.slane %v297, 0
    %v300 = vperm.slane %v297, 1
    %v301 = vperm.slane %v297, 2
    %v302 = vperm.slane %v297, 3
    %v499 = vunpack.c.l.b16 %v105
    %v500 = vunpack.c.h.b16 %v105
    %v501 = vunpack.c.l.b16 %v106
    %v502 = vunpack.c.h.b16 %v106
    %v503 = vunpack.c.l.b16 %v107
    %v504 = vunpack.c.h.b16 %v107
    %v505 = vunpack.c.l.b16 %v108
    %v506 = vunpack.c.h.b16 %v108
    %v507 = vunpack.c.l.b16 %v109
    %v508 = vunpack.c.h.b16 %v109
    %v509 = vunpack.c.l.b16 %v110
    %v510 = vunpack.c.h.b16 %v110
    %v511 = vunpack.c.l.b16 %v111
    %v512 = vunpack.c.h.b16 %v111
    %v513 = vunpack.c.l.b16 %v112
    %v514 = vunpack.c.h.b16 %v112
    %v515 = vunpack.c.l.b16 %v113
    %v516 = vunpack.c.h.b16 %v113
    %v517 = vunpack.c.l.b16 %v114
    %v518 = vunpack.c.h.b16 %v114
    %v519 = vunpack.c.l.b16 %v115
    %v520 = vunpack.c.h.b16 %v115
    %v521 = vunpack.c.l.b16 %v116
    %v522 = vunpack.c.h.b16 %v116
    %v523 = vunpack.c.l.b16 %v117
    %v524 = vunpack.c.h.b16 %v117
    %v525 = vunpack.c.l.b16 %v118
    %v526 = vunpack.c.h.b16 %v118
    %v527 = vunpack.c.l.b16 %v119
    %v528 = vunpack.c.h.b16 %v119
    %v529 = vunpack.c.l.b16 %v120
    %v530 = vunpack.c.h.b16 %v120
    %v531 = vunpack.c.l.b16 %v121
    %v532 = vunpack.c.h.b16 %v121
    %v533 = vunpack.c.l.b16 %v122
    %v534 = vunpack.c.h.b16 %v122
    %v535 = vunpack.c.l.b16 %v123
    %v536 = vunpack.c.h.b16 %v123
    %v537 = vunpack.c.l.b16 %v124
    %v538 = vunpack.c.h.b16 %v124
    %v539 = vunpack.c.l.b16 %v125
    %v540 = vunpack.c.h.b16 %v125
    %v541 = vunpack.c.l.b16 %v126
    %v542 = vunpack.c.h.b16 %v126
    %v543 = vunpack.c.l.b16 %v127
    %v544 = vunpack.c.h.b16 %v127
    %v545 = vunpack.c.l.b16 %v128
    %v546 = vunpack.c.h.b16 %v128
    %v547 = vunpack.c.l.b16 %v129
    %v548 = vunpack.c.h.b16 %v129
    %v549 = vunpack.c.l.b16 %v130
    %v550 = vunpack.c.h.b16 %v130
    %v551 = vunpack.c.l.b16 %v131
    %v552 = vunpack.c.h.b16 %v131
    %v553 = vunpack.c.l.b16 %v132
    %v554 = vunpack.c.h.b16 %v132
    %v555 = vunpack.c.l.b16 %v133
    %v556 = vunpack.c.h.b16 %v133
    %v557 = vunpack.c.l.b16 %v134
    %v558 = vunpack.c.h.b16 %v134
    %v559 = vunpack.c.l.b16 %v135
    %v560 = vunpack.c.h.b16 %v135
    %v561 = vunpack.c.l.b16 %v136
    %v562 = vunpack.c.h.b16 %v136
    %v563 = vunpack.c.l.b16 %v137
    %v564 = vunpack.c.h.b16 %v137
    %v565 = vunpack.c.l.b16 %v138
    %v566 = vunpack.c.h.b16 %v138
    %v567 = vunpack.c.l.b16 %v139
    %v568 = vunpack.c.h.b16 %v139
    %v569 = vunpack.c.l.b16 %v140
    %v570 = vunpack.c.h.b16 %v140
    %v571 = vunpack.c.l.b16 %v141
    %v572 = vunpack.c.h.b16 %v141
    %v573 = vunpack.c.l.b16 %v142
    %v574 = vunpack.c.h.b16 %v142
    %v575 = vunpack.c.l.b16 %v143
    %v576 = vunpack.c.h.b16 %v143
    %v577 = vunpack.c.l.b16 %v144
    %v578 = vunpack.c.h.b16 %v144
    %v579 = vunpack.c.l.b16 %v145
    %v580 = vunpack.c.h.b16 %v145
    %v581 = vunpack.c.l.b16 %v146
    %v582 = vunpack.c.h.b16 %v146
    %v583 = vunpack.c.l.b16 %v147
    %v584 = vunpack.c.h.b16 %v147
    %v585 = vunpack.c.l.b16 %v148
    %v586 = vunpack.c.h.b16 %v148
    %v587 = vunpack.c.l.b16 %v149
    %v588 = vunpack.c.h.b16 %v149
    %v589 = vunpack.c.l.b16 %v150
    %v590 = vunpack.c.h.b16 %v150
    %v591 = vunpack.c.l.b16 %v151
    %v592 = vunpack.c.h.b16 %v151
    %v593 = vunpack.c.l.b16 %v152
    %v594 = vunpack.c.h.b16 %v152
    %v595 = vunpack.c.l.b16 %v153
    %v596 = vunpack.c.h.b16 %v153
    %v597 = vunpack.c.l.b16 %v154
    %v598 = vunpack.c.h.b16 %v154
    %v599 = vunpack.c.l.b16 %v155
    %v600 = vunpack.c.h.b16 %v155
    %v601 = vunpack.c.l.b16 %v156
    %v602 = vunpack.c.h.b16 %v156
    %v603 = vunpack.c.l.b16 %v157
    %v604 = vunpack.c.h.b16 %v157
    %v605 = vunpack.c.l.b16 %v158
    %v606 = vunpack.c.h.b16 %v158
    %v607 = vunpack.c.l.b16 %v159
    %v608 = vunpack.c.h.b16 %v159
    %v609 = vunpack.c.l.b16 %v160
    %v610 = vunpack.c.h.b16 %v160
    %v611 = vunpack.c.l.b16 %v161
    %v612 = vunpack.c.h.b16 %v161
    %v613 = vunpack.c.l.b16 %v162
    %v614 = vunpack.c.h.b16 %v162
    %v615 = vunpack.c.l.b16 %v163
    %v616 = vunpack.c.h.b16 %v163
    %v617 = vunpack.c.l.b16 %v164
    %v618 = vunpack.c.h.b16 %v164
    %v619 = vunpack.c.l.b16 %v165
    %v620 = vunpack.c.h.b16 %v165
    %v621 = vunpack.c.l.b16 %v166
    %v622 = vunpack.c.h.b16 %v166
    %v623 = vunpack.c.l.b16 %v167
    %v624 = vunpack.c.h.b16 %v167
    %v625 = vunpack.c.l.b16 %v168
    %v626 = vunpack.c.h.b16 %v168
    %v627 = vunpack.c.l.b16 %v169
    %v628 = vunpack.c.h.b16 %v169
    %v629 = vunpack.c.l.b16 %v170
    %v630 = vunpack.c.h.b16 %v170
    %v631 = vunpack.c.l.b16 %v171
    %v632 = vunpack.c.h.b16 %v171
    %v633 = vunpack.c.l.b16 %v172
    %v634 = vunpack.c.h.b16 %v172
    %v635 = vunpack.c.l.b16 %v173
    %v636 = vunpack.c.h.b16 %v173
    %v637 = vunpack.c.l.b16 %v174
    %v638 = vunpack.c.h.b16 %v174
    %v639 = vunpack.c.l.b16 %v175
    %v640 = vunpack.c.h.b16 %v175
    %v641 = vunpack.c.l.b16 %v176
    %v642 = vunpack.c.h.b16 %v176
    %v643 = vunpack.c.l.b16 %v177
    %v644 = vunpack.c.h.b16 %v177
    %v645 = vunpack.c.l.b16 %v178
    %v646 = vunpack.c.h.b16 %v178
    %v647 = vunpack.c.l.b16 %v179
    %v648 = vunpack.c.h.b16 %v179
    %v649 = vunpack.c.l.b16 %v180
    %v650 = vunpack.c.h.b16 %v180
    %v651 = vunpack.c.l.b16 %v181
    %v652 = vunpack.c.h.b16 %v181
    %v653 = vunpack.c.l.b16 %v182
    %v654 = vunpack.c.h.b16 %v182
    %v655 = vunpack.c.l.b16 %v183
    %v656 = vunpack.c.h.b16 %v183
    %v657 = vunpack.c.l.b16 %v184
    %v658 = vunpack.c.h.b16 %v184
    %v659 = vunpack.c.l.b16 %v185
    %v660 = vunpack.c.h.b16 %v185
    %v661 = vunpack.c.l.b16 %v186
    %v662 = vunpack.c.h.b16 %v186
    %v663 = vunpack.c.l.b16 %v187
    %v664 = vunpack.c.h.b16 %v187
    %v665 = vunpack.c.l.b16 %v188
    %v666 = vunpack.c.h.b16 %v188
    %v667 = vunpack.c.l.b16 %v189
    %v668 = vunpack.c.h.b16 %v189
    %v669 = vunpack.c.l.b16 %v190
    %v670 = vunpack.c.h.b16 %v190
    %v671 = vunpack.c.l.b16 %v191
    %v672 = vunpack.c.h.b16 %v191
    %v673 = vunpack.c.l.b16 %v192
    %v674 = vunpack.c.h.b16 %v192
    %v675 = vunpack.c.l.b16 %v193
    %v676 = vunpack.c.h.b16 %v193
    %v677 = vunpack.c.l.b16 %v194
    %v678 = vunpack.c.h.b16 %v194
    %v679 = vunpack.c.l.b16 %v195
    %v680 = vunpack.c.h.b16 %v195
    %v681 = vunpack.c.l.b16 %v196
    %v682 = vunpack.c.h.b16 %v196
    %v683 = vunpack.c.l.b16 %v197
    %v684 = vunpack.c.h.b16 %v197
    %v685 = vunpack.c.l.b16 %v198
    %v686 = vunpack.c.h.b16 %v198
    %v687 = vunpack.c.l.b16 %v199
    %v688 = vunpack.c.h.b16 %v199
    %v689 = vunpack.c.l.b16 %v200
    %v690 = vunpack.c.h.b16 %v200
    %v691 = vunpack.c.l.b16 %v201
    %v692 = vunpack.c.h.b16 %v201
    %v693 = vunpack.c.l.b16 %v202
    %v694 = vunpack.c.h.b16 %v202
    %v695 = vunpack.c.l.b16 %v203
    %v696 = vunpack.c.h.b16 %v203
    %v697 = vunpack.c.l.b16 %v204
    %v698 = vunpack.c.h.b16 %v204
    %v699 = vunpack.c.l.b16 %v205
    %v700 = vunpack.c.h.b16 %v205
    %v701 = vunpack.c.l.b16 %v206
    %v702 = vunpack.c.h.b16 %v206
    %v703 = vunpack.c.l.b16 %v207
    %v704 = vunpack.c.h.b16 %v207
    %v705 = vunpack.c.l.b16 %v208
    %v706 = vunpack.c.h.b16 %v208
    %v707 = vunpack.c.l.b16 %v209
    %v708 = vunpack.c.h.b16 %v209
    %v709 = vunpack.c.l.b16 %v210
    %v710 = vunpack.c.h.b16 %v210
    %v711 = vunpack.c.l.b16 %v211
    %v712 = vunpack.c.h.b16 %v211
    %v713 = vunpack.c.l.b16 %v212
    %v714 = vunpack.c.h.b16 %v212
    %v715 = vunpack.c.l.b16 %v213
    %v716 = vunpack.c.h.b16 %v213
    %v717 = vunpack.c.l.b16 %v214
    %v718 = vunpack.c.h.b16 %v214
    %v719 = vunpack.c.l.b16 %v215
    %v720 = vunpack.c.h.b16 %v215
    %v721 = vunpack.c.l.b16 %v216
    %v722 = vunpack.c.h.b16 %v216
    %v723 = vunpack.c.l.b16 %v217
    %v724 = vunpack.c.h.b16 %v217
    %v725 = vunpack.c.l.b16 %v218
    %v726 = vunpack.c.h.b16 %v218
    %v727 = vunpack.c.l.b16 %v219
    %v728 = vunpack.c.h.b16 %v219
    %v729 = vunpack.c.l.b16 %v220
    %v730 = vunpack.c.h.b16 %v220
    %v731 = vunpack.c.l.b16 %v221
    %v732 = vunpack.c.h.b16 %v221
    %v733 = vunpack.c.l.b16 %v222
    %v734 = vunpack.c.h.b16 %v222
    %v735 = vunpack.c.l.b16 %v223
    %v736 = vunpack.c.h.b16 %v223
    %v737 = vunpack.c.l.b16 %v224
    %v738 = vunpack.c.h.b16 %v224
    %v739 = vunpack.c.l.b16 %v225
    %v740 = vunpack.c.h.b16 %v225
    %v741 = vunpack.c.l.b16 %v226
    %v742 = vunpack.c.h.b16 %v226
    %v743 = vunpack.c.l.b16 %v227
    %v744 = vunpack.c.h.b16 %v227
    %v745 = vunpack.c.l.b16 %v228
    %v746 = vunpack.c.h.b16 %v228
    %v747 = vunpack.c.l.b16 %v229
    %v748 = vunpack.c.h.b16 %v229
    %v749 = vunpack.c.l.b16 %v230
    %v750 = vunpack.c.h.b16 %v230
    %v751 = vunpack.c.l.b16 %v231
    %v752 = vunpack.c.h.b16 %v231
    %v753 = vunpack.c.l.b16 %v232
    %v754 = vunpack.c.h.b16 %v232
    %v755 = vunpack.c.l.b16 %v233
    %v756 = vunpack.c.h.b16 %v233
    %v757 = vunpack.c.l.b16 %v234
    %v758 = vunpack.c.h.b16 %v234
    %v759 = vunpack.c.l.b16 %v235
    %v760 = vunpack.c.h.b16 %v235
    %v761 = vunpack.c.l.b16 %v236
    %v762 = vunpack.c.h.b16 %v236
    %v763 = vunpack.c.l.b16 %v237
    %v764 = vunpack.c.h.b16 %v237
    %v765 = vunpack.c.l.b16 %v238
    %v766 = vunpack.c.h.b16 %v238
    %v767 = vunpack.c.l.b16 %v239
    %v768 = vunpack.c.h.b16 %v239
    %v769 = vunpack.c.l.b16 %v240
    %v770 = vunpack.c.h.b16 %v240
    %v771 = vunpack.c.l.b16 %v241
    %v772 = vunpack.c.h.b16 %v241
    %v773 = vunpack.c.l.b16 %v242
    %v774 = vunpack.c.h.b16 %v242
    %v775 = vunpack.c.l.b16 %v243
    %v776 = vunpack.c.h.b16 %v243
    %v777 = vunpack.c.l.b16 %v244
    %v778 = vunpack.c.h.b16 %v244
    %v779 = vunpack.c.l.b16 %v245
    %v780 = vunpack.c.h.b16 %v245
    %v781 = vunpack.c.l.b16 %v246
    %v782 = vunpack.c.h.b16 %v246
    %v783 = vunpack.c.l.b16 %v247
    %v784 = vunpack.c.h.b16 %v247
    %v785 = vunpack.c.l.b16 %v248
    %v786 = vunpack.c.h.b16 %v248
    %v787 = vunpack.c.l.b16 %v249
    %v788 = vunpack.c.h.b16 %v249
    %v789 = vunpack.c.l.b16 %v250
    %v790 = vunpack.c.h.b16 %v250
    %v791 = vunpack.c.l.b16 %v251
    %v792 = vunpack.c.h.b16 %v251
    %v793 = vunpack.c.l.b16 %v252
    %v794 = vunpack.c.h.b16 %v252
    %v795 = vunpack.c.l.b16 %v253
    %v796 = vunpack.c.h.b16 %v253
    %v797 = vunpack.c.l.b16 %v254
    %v798 = vunpack.c.h.b16 %v254
    %v799 = vunpack.c.l.b16 %v255
    %v800 = vunpack.c.h.b16 %v255
    %v801 = vunpack.c.l.b16 %v256
    %v802 = vunpack.c.h.b16 %v256
    %v803 = vunpack.c.l.b16 %v257
    %v804 = vunpack.c.h.b16 %v257
    %v805 = vunpack.c.l.b16 %v258
    %v806 = vunpack.c.h.b16 %v258
    %v807 = vunpack.c.l.b16 %v259
    %v808 = vunpack.c.h.b16 %v259
    %v809 = vunpack.c.l.b16 %v260
    %v810 = vunpack.c.h.b16 %v260
    %v811 = vunpack.c.l.b16 %v261
    %v812 = vunpack.c.h.b16 %v261
    %v813 = vunpack.c.l.b16 %v262
    %v814 = vunpack.c.h.b16 %v262
    %v815 = vunpack.c.l.b16 %v263
    %v816 = vunpack.c.h.b16 %v263
    %v817 = vunpack.c.l.b16 %v264
    %v818 = vunpack.c.h.b16 %v264
    %v819 = vunpack.c.l.b16 %v265
    %v820 = vunpack.c.h.b16 %v265
    %v821 = vunpack.c.l.b16 %v266
    %v822 = vunpack.c.h.b16 %v266
    %v823 = vunpack.c.l.b16 %v267
    %v824 = vunpack.c.h.b16 %v267
    %v825 = vunpack.c.l.b16 %v268
    %v826 = vunpack.c.h.b16 %v268
    %v827 = vunpack.c.l.b16 %v269
    %v828 = vunpack.c.h.b16 %v269
    %v829 = vunpack.c.l.b16 %v270
    %v830 = vunpack.c.h.b16 %v270
    %v831 = vunpack.c.l.b16 %v271
    %v832 = vunpack.c.h.b16 %v271
    %v833 = vunpack.c.l.b16 %v272
    %v834 = vunpack.c.h.b16 %v272
    %v835 = vunpack.c.l.b16 %v273
    %v836 = vunpack.c.h.b16 %v273
    %v837 = vunpack.c.l.b16 %v274
    %v838 = vunpack.c.h.b16 %v274
    %v839 = vunpack.c.l.b16 %v275
    %v840 = vunpack.c.h.b16 %v275
    %v841 = vunpack.c.l.b16 %v276
    %v842 = vunpack.c.h.b16 %v276
    %v843 = vunpack.c.l.b16 %v277
    %v844 = vunpack.c.h.b16 %v277
    %v845 = vunpack.c.l.b16 %v278
    %v846 = vunpack.c.h.b16 %v278
    %v847 = vunpack.c.l.b16 %v279
    %v848 = vunpack.c.h.b16 %v279
    %v849 = vunpack.c.l.b16 %v280
    %v850 = vunpack.c.h.b16 %v280
    %v851 = vunpack.c.l.b16 %v281
    %v852 = vunpack.c.h.b16 %v281
    %v853 = vunpack.c.l.b16 %v282
    %v854 = vunpack.c.h.b16 %v282
    %v855 = vunpack.c.l.b16 %v283
    %v856 = vunpack.c.h.b16 %v283
    %v857 = vunpack.c.l.b16 %v284
    %v858 = vunpack.c.h.b16 %v284
    %v859 = vunpack.c.l.b16 %v285
    %v860 = vunpack.c.h.b16 %v285
    %v861 = vunpack.c.l.b16 %v286
    %v862 = vunpack.c.h.b16 %v286
    %v863 = vunpack.c.l.b16 %v287
    %v864 = vunpack.c.h.b16 %v287
    %v865 = vunpack.c.l.b16 %v288
    %v866 = vunpack.c.h.b16 %v288
    %v867 = vunpack.c.l.b16 %v289
    %v868 = vunpack.c.h.b16 %v289
    %v869 = vunpack.c.l.b16 %v290
    %v870 = vunpack.c.h.b16 %v290
    %v871 = vunpack.c.l.b16 %v291
    %v872 = vunpack.c.h.b16 %v291
    %v873 = vunpack.c.l.b16 %v292
    %v874 = vunpack.c.h.b16 %v292
    %v875 = vunpack.c.l.b16 %v293
    %v876 = vunpack.c.h.b16 %v293
    %v877 = vunpack.c.l.b16 %v294
    %v878 = vunpack.c.h.b16 %v294
    %v879 = vunpack.c.l.b16 %v295
    %v880 = vunpack.c.h.b16 %v295
    %v881 = vunpack.c.l.b16 %v296
    %v882 = vunpack.c.h.b16 %v296
    %v883 = vpack.c.b16 %v503, %v499
    %v884 = vpack.c.b16 %v504, %v500
    %v885 = vpack.c.b16 %v505, %v501
    %v886 = vpack.c.b16 %v506, %v502
    %v887 = vpack.c.b16 %v511, %v507
    %v888 = vpack.c.b16 %v512, %v508
    %v889 = vpack.c.b16 %v513, %v509
    %v890 = vpack.c.b16 %v514, %v510
    %v891 = vpack.c.b16 %v519, %v515
    %v892 = vpack.c.b16 %v520, %v516
    %v893 = vpack.c.b16 %v521, %v517
    %v894 = vpack.c.b16 %v522, %v518
    %v895 = vpack.c.b16 %v527, %v523
    %v896 = vpack.c.b16 %v528, %v524
    %v897 = vpack.c.b16 %v529, %v525
    %v898 = vpack.c.b16 %v530, %v526
    %v899 = vpack.c.b16 %v535, %v531
    %v900 = vpack.c.b16 %v536, %v532
    %v901 = vpack.c.b16 %v537, %v533
    %v902 = vpack.c.b16 %v538, %v534
    %v903 = vpack.c.b16 %v543, %v539
    %v904 = vpack.c.b16 %v544, %v540
    %v905 = vpack.c.b16 %v545, %v541
    %v906 = vpack.c.b16 %v546, %v542
    %v907 = vpack.c.b16 %v551, %v547
    %v908 = vpack.c.b16 %v552, %v548
    %v909 = vpack.c.b16 %v553, %v549
    %v910 = vpack.c.b16 %v554, %v550
    %v911 = vpack.c.b16 %v559, %v555
    %v912 = vpack.c.b16 %v560, %v556
    %v913 = vpack.c.b16 %v561, %v557
    %v914 = vpack.c.b16 %v562, %v558
    %v915 = vpack.c.b16 %v567, %v563
    %v916 = vpack.c.b16 %v568, %v564
    %v917 = vpack.c.b16 %v569, %v565
    %v918 = vpack.c.b16 %v570, %v566
    %v919 = vpack.c.b16 %v575, %v571
    %v920 = vpack.c.b16 %v576, %v572
    %v921 = vpack.c.b16 %v577, %v573
    %v922 = vpack.c.b16 %v578, %v574
    %v923 = vpack.c.b16 %v583, %v579
    %v924 = vpack.c.b16 %v584, %v580
    %v925 = vpack.c.b16 %v585, %v581
    %v926 = vpack.c.b16 %v586, %v582
    %v927 = vpack.c.b16 %v591, %v587
    %v928 = vpack.c.b16 %v592, %v588
    %v929 = vpack.c.b16 %v593, %v589
    %v930 = vpack.c.b16 %v594, %v590
    %v931 = vpack.c.b16 %v599, %v595
    %v932 = vpack.c.b16 %v600, %v596
    %v933 = vpack.c.b16 %v601, %v597
    %v934 = vpack.c.b16 %v602, %v598
    %v935 = vpack.c.b16 %v607, %v603
    %v936 = vpack.c.b16 %v608, %v604
    %v937 = vpack.c.b16 %v609, %v605
    %v938 = vpack.c.b16 %v610, %v606
    %v939 = vpack.c.b16 %v615, %v611
    %v940 = vpack.c.b16 %v616, %v612
    %v941 = vpack.c.b16 %v617, %v613
    %v942 = vpack.c.b16 %v618, %v614
    %v943 = vpack.c.b16 %v623, %v619
    %v944 = vpack.c.b16 %v624, %v620
    %v945 = vpack.c.b16 %v625, %v621
    %v946 = vpack.c.b16 %v626, %v622
    %v947 = vpack.c.b16 %v631, %v627
    %v948 = vpack.c.b16 %v632, %v628
    %v949 = vpack.c.b16 %v633, %v629
    %v950 = vpack.c.b16 %v634, %v630
    %v951 = vpack.c.b16 %v639, %v635
    %v952 = vpack.c.b16 %v640, %v636
    %v953 = vpack.c.b16 %v641, %v637
    %v954 = vpack.c.b16 %v642, %v638
    %v955 = vpack.c.b16 %v647, %v643
    %v956 = vpack.c.b16 %v648, %v644
    %v957 = vpack.c.b16 %v649, %v645
    %v958 = vpack.c.b16 %v650, %v646
    %v959 = vpack.c.b16 %v655, %v651
    %v960 = vpack.c.b16 %v656, %v652
    %v961 = vpack.c.b16 %v657, %v653
    %v962 = vpack.c.b16 %v658, %v654
    %v963 = vpack.c.b16 %v663, %v659
    %v964 = vpack.c.b16 %v664, %v660
    %v965 = vpack.c.b16 %v665, %v661
    %v966 = vpack.c.b16 %v666, %v662
    %v967 = vpack.c.b16 %v671, %v667
    %v968 = vpack.c.b16 %v672, %v668
    %v969 = vpack.c.b16 %v673, %v669
    %v970 = vpack.c.b16 %v674, %v670
    %v971 = vpack.c.b16 %v679, %v675
    %v972 = vpack.c.b16 %v680, %v676
    %v973 = vpack.c.b16 %v681, %v677
    %v974 = vpack.c.b16 %v682, %v678
    %v975 = vpack.c.b16 %v687, %v683
    %v976 = vpack.c.b16 %v688, %v684
    %v977 = vpack.c.b16 %v689, %v685
    %v978 = vpack.c.b16 %v690, %v686
    %v979 = vpack.c.b16 %v695, %v691
    %v980 = vpack.c.b16 %v696, %v692
    %v981 = vpack.c.b16 %v697, %v693
    %v982 = vpack.c.b16 %v698, %v694
    %v983 = vpack.c.b16 %v703, %v699
    %v984 = vpack.c.b16 %v704, %v700
    %v985 = vpack.c.b16 %v705, %v701
    %v986 = vpack.c.b16 %v706, %v702
    %v987 = vpack.c.b16 %v711, %v707
    %v988 = vpack.c.b16 %v712, %v708
    %v989 = vpack.c.b16 %v713, %v709
    %v990 = vpack.c.b16 %v714, %v710
    %v991 = vpack.c.b16 %v719, %v715
    %v992 = vpack.c.b16 %v720, %v716
    %v993 = vpack.c.b16 %v721, %v717
    %v994 = vpack.c.b16 %v722, %v718
    %v995 = vpack.c.b16 %v727, %v723
    %v996 = vpack.c.b16 %v728, %v724
    %v997 = vpack.c.b16 %v729, %v725
    %v998 = vpack.c.b16 %v730, %v726
    %v999 = vpack.c.b16 %v735, %v731
    %v1000 = vpack.c.b16 %v736, %v732
    %v1001 = vpack.c.b16 %v737, %v733
    %v1002 = vpack.c.b16 %v738, %v734
    %v1003 = vpack.c.b16 %v743, %v739
    %v1004 = vpack.c.b16 %v744, %v740
    %v1005 = vpack.c.b16 %v745, %v741
    %v1006 = vpack.c.b16 %v746, %v742
    %v1007 = vpack.c.b16 %v751, %v747
    %v1008 = vpack.c.b16 %v752, %v748
    %v1009 = vpack.c.b16 %v753, %v749
    %v1010 = vpack.c.b16 %v754, %v750
    %v1011 = vpack.c.b16 %v759, %v755
    %v1012 = vpack.c.b16 %v760, %v756
    %v1013 = vpack.c.b16 %v761, %v757
    %v1014 = vpack.c.b16 %v762, %v758
    %v1015 = vpack.c.b16 %v767, %v763
    %v1016 = vpack.c.b16 %v768, %v764
    %v1017 = vpack.c.b16 %v769, %v765
    %v1018 = vpack.c.b16 %v770, %v766
    %v1019 = vpack.c.b16 %v775, %v771
    %v1020 = vpack.c.b16 %v776, %v772
    %v1021 = vpack.c.b16 %v777, %v773
    %v1022 = vpack.c.b16 %v778, %v774
    %v1023 = vpack.c.b16 %v783, %v779
    %v1024 = vpack.c.b16 %v784, %v780
    %v1025 = vpack.c.b16 %v785, %v781
    %v1026 = vpack.c.b16 %v786, %v782
    %v1027 = vpack.c.b16 %v791, %v787
    %v1028 = vpack.c.b16 %v792, %v788
    %v1029 = vpack.c.b16 %v793, %v789
    %v1030 = vpack.c.b16 %v794, %v790
    %v1031 = vpack.c.b16 %v799, %v795
    %v1032 = vpack.c.b16 %v800, %v796
    %v1033 = vpack.c.b16 %v801, %v797
    %v1034 = vpack.c.b16 %v802, %v798
    %v1035 = vpack.c.b16 %v807, %v803
    %v1036 = vpack.c.b16 %v808, %v804
    %v1037 = vpack.c.b16 %v809, %v805
    %v1038 = vpack.c.b16 %v810, %v806
    %v1039 = vpack.c.b16 %v815, %v811
    %v1040 = vpack.c.b16 %v816, %v812
    %v1041 = vpack.c.b16 %v817, %v813
    %v1042 = vpack.c.b16 %v818, %v814
    %v1043 = vpack.c.b16 %v823, %v819
    %v1044 = vpack.c.b16 %v824, %v820
    %v1045 = vpack.c.b16 %v825, %v821
    %v1046 = vpack.c.b16 %v826, %v822
    %v1047 = vpack.c.b16 %v831, %v827
    %v1048 = vpack.c.b16 %v832, %v828
    %v1049 = vpack.c.b16 %v833, %v829
    %v1050 = vpack.c.b16 %v834, %v830
    %v1051 = vpack.c.b16 %v839, %v835
    %v1052 = vpack.c.b16 %v840, %v836
    %v1053 = vpack.c.b16 %v841, %v837
    %v1054 = vpack.c.b16 %v842, %v838
    %v1055 = vpack.c.b16 %v847, %v843
    %v1056 = vpack.c.b16 %v848, %v844
    %v1057 = vpack.c.b16 %v849, %v845
    %v1058 = vpack.c.b16 %v850, %v846
    %v1059 = vpack.c.b16 %v855, %v851
    %v1060 = vpack.c.b16 %v856, %v852
    %v1061 = vpack.c.b16 %v857, %v853
    %v1062 = vpack.c.b16 %v858, %v854
    %v1063 = vpack.c.b16 %v863, %v859
    %v1064 = vpack.c.b16 %v864, %v860
    %v1065 = vpack.c.b16 %v865, %v861
    %v1066 = vpack.c.b16 %v866, %v862
    %v1067 = vpack.c.b16 %v871, %v867
    %v1068 = vpack.c.b16 %v872, %v868
    %v1069 = vpack.c.b16 %v873, %v869
    %v1070 = vpack.c.b16 %v874, %v870
    %v1071 = vpack.c.b16 %v879, %v875
    %v1072 = vpack.c.b16 %v880, %v876
    %v1073 = vpack.c.b16 %v881, %v877
    %v1074 = vpack.c.b16 %v882, %v878
    %1267 = vmatpush.bf16.msra.mxu0 %v911
    %1268 = vmatpush.bf16.msra.mxu0 %v907
    %1269 = vmatpush.bf16.msra.mxu0 %v903
    %1270 = vmatpush.bf16.msra.mxu0 %v899
    %1271 = vmatpush.bf16.msra.mxu0 %v895
    %1272 = vmatpush.bf16.msra.mxu0 %v891
    %1273 = vmatpush.bf16.msra.mxu0 %v887
    %1274 = vmatpush.bf16.msra.mxu0 %v883
    %1275 = vmatmul.bf16.gmra.mxu0 %v99
    %v1276 = vpop.f32.mrf.mxu0
    %v1277 = vadd.f32 %v299, %v1276
    %v1278 = vpop.f32.mrf.mxu0
    %1279 = vdwg.mxu0
    %1280 = vmatpush.bf16.msra.mxu0 %v943
    %1281 = vmatpush.bf16.msra.mxu0 %v939
    %1282 = vmatpush.bf16.msra.mxu0 %v935
    %1283 = vmatpush.bf16.msra.mxu0 %v931
    %1284 = vmatpush.bf16.msra.mxu0 %v927
    %1285 = vmatpush.bf16.msra.mxu0 %v923
    %1286 = vmatpush.bf16.msra.mxu0 %v919
    %1287 = vmatpush.bf16.msra.mxu0 %v915
    %1288 = vmatmul.bf16.gmra.mxu0 %v100
    %v1289 = vpop.f32.mrf.mxu0
    %v1290 = vadd.f32 %v1277, %v1289
    %v1291 = vpop.f32.mrf.mxu0
    %1292 = vdwg.mxu0
    %1293 = vmatpush.bf16.msra.mxu0 %v975
    %1294 = vmatpush.bf16.msra.mxu0 %v971
    %1295 = vmatpush.bf16.msra.mxu0 %v967
    %1296 = vmatpush.bf16.msra.mxu0 %v963
    %1297 = vmatpush.bf16.msra.mxu0 %v959
    %1298 = vmatpush.bf16.msra.mxu0 %v955
    %1299 = vmatpush.bf16.msra.mxu0 %v951
    %1300 = vmatpush.bf16.msra.mxu0 %v947
    %1301 = vmatmul.bf16.gmra.mxu0 %v101
    %v1302 = vpop.f32.mrf.mxu0
    %v1303 = vadd.f32 %v1290, %v1302
    %v1304 = vpop.f32.mrf.mxu0
    %1305 = vdwg.mxu0
    %1306 = vmatpush.bf16.msra.mxu0 %v1007
    %1307 = vmatpush.bf16.msra.mxu0 %v1003
    %1308 = vmatpush.bf16.msra.mxu0 %v999
    %1309 = vmatpush.bf16.msra.mxu0 %v995
    %1310 = vmatpush.bf16.msra.mxu0 %v991
    %1311 = vmatpush.bf16.msra.mxu0 %v987
    %1312 = vmatpush.bf16.msra.mxu0 %v983
    %1313 = vmatpush.bf16.msra.mxu0 %v979
    %1314 = vmatmul.bf16.gmra.mxu0 %v102
    %v1315 = vpop.f32.mrf.mxu0
    %v1316 = vadd.f32 %v1303, %v1315
    %v1317 = vpop.f32.mrf.mxu0
    %1318 = vdwg.mxu0
    %1319 = vmatpush.bf16.msra.mxu0 %v1039
    %1320 = vmatpush.bf16.msra.mxu0 %v1035
    %1321 = vmatpush.bf16.msra.mxu0 %v1031
    %1322 = vmatpush.bf16.msra.mxu0 %v1027
    %1323 = vmatpush.bf16.msra.mxu0 %v1023
    %1324 = vmatpush.bf16.msra.mxu0 %v1019
    %1325 = vmatpush.bf16.msra.mxu0 %v1015
    %1326 = vmatpush.bf16.msra.mxu0 %v1011
    %1327 = vmatmul.bf16.gmra.mxu0 %v103
    %v1328 = vpop.f32.mrf.mxu0
    %v1329 = vadd.f32 %v1316, %v1328
    %v1330 = vpop.f32.mrf.mxu0
    %1331 = vdwg.mxu0
    %1332 = vmatpush.bf16.msra.mxu0 %v1071
    %1333 = vmatpush.bf16.msra.mxu0 %v1067
    %1334 = vmatpush.bf16.msra.mxu0 %v1063
    %1335 = vmatpush.bf16.msra.mxu0 %v1059
    %1336 = vmatpush.bf16.msra.mxu0 %v1055
    %1337 = vmatpush.bf16.msra.mxu0 %v1051
    %1338 = vmatpush.bf16.msra.mxu0 %v1047
    %1339 = vmatpush.bf16.msra.mxu0 %v1043
    %1340 = vmatmul.bf16.gmra.mxu0 %v104
    %v1341 = vpop.f32.mrf.mxu0
    %v1342 = vadd.f32 %v1329, %v1341
    %v1343 = vpop.f32.mrf.mxu0
    %1344 = vdwg.mxu0
    %1345 = vmatpush.bf16.msra.mxu0 %v912
    %1346 = vmatpush.bf16.msra.mxu0 %v908
    %1347 = vmatpush.bf16.msra.mxu0 %v904
    %1348 = vmatpush.bf16.msra.mxu0 %v900
    %1349 = vmatpush.bf16.msra.mxu0 %v896
    %1350 = vmatpush.bf16.msra.mxu0 %v892
    %1351 = vmatpush.bf16.msra.mxu0 %v888
    %1352 = vmatpush.bf16.msra.mxu0 %v884
    %1353 = vmatmul.bf16.gmra.mxu0 %v99
    %v1354 = vpop.f32.mrf.mxu0
    %v1355 = vadd.f32 %v300, %v1354
    %v1356 = vpop.f32.mrf.mxu0
    %1357 = vdwg.mxu0
    %1358 = vmatpush.bf16.msra.mxu0 %v944
    %1359 = vmatpush.bf16.msra.mxu0 %v940
    %1360 = vmatpush.bf16.msra.mxu0 %v936
    %1361 = vmatpush.bf16.msra.mxu0 %v932
    %1362 = vmatpush.bf16.msra.mxu0 %v928
    %1363 = vmatpush.bf16.msra.mxu0 %v924
    %1364 = vmatpush.bf16.msra.mxu0 %v920
    %1365 = vmatpush.bf16.msra.mxu0 %v916
    %1366 = vmatmul.bf16.gmra.mxu0 %v100
    %v1367 = vpop.f32.mrf.mxu0
    %v1368 = vadd.f32 %v1355, %v1367
    %v1369 = vpop.f32.mrf.mxu0
    %1370 = vdwg.mxu0
    %1371 = vmatpush.bf16.msra.mxu0 %v976
    %1372 = vmatpush.bf16.msra.mxu0 %v972
    %1373 = vmatpush.bf16.msra.mxu0 %v968
    %1374 = vmatpush.bf16.msra.mxu0 %v964
    %1375 = vmatpush.bf16.msra.mxu0 %v960
    %1376 = vmatpush.bf16.msra.mxu0 %v956
    %1377 = vmatpush.bf16.msra.mxu0 %v952
    %1378 = vmatpush.bf16.msra.mxu0 %v948
    %1379 = vmatmul.bf16.gmra.mxu0 %v101
    %v1380 = vpop.f32.mrf.mxu0
    %v1381 = vadd.f32 %v1368, %v1380
    %v1382 = vpop.f32.mrf.mxu0
    %1383 = vdwg.mxu0
    %1384 = vmatpush.bf16.msra.mxu0 %v1008
    %1385 = vmatpush.bf16.msra.mxu0 %v1004
    %1386 = vmatpush.bf16.msra.mxu0 %v1000
    %1387 = vmatpush.bf16.msra.mxu0 %v996
    %1388 = vmatpush.bf16.msra.mxu0 %v992
    %1389 = vmatpush.bf16.msra.mxu0 %v988
    %1390 = vmatpush.bf16.msra.mxu0 %v984
    %1391 = vmatpush.bf16.msra.mxu0 %v980
    %1392 = vmatmul.bf16.gmra.mxu0 %v102
    %v1393 = vpop.f32.mrf.mxu0
    %v1394 = vadd.f32 %v1381, %v1393
    %v1395 = vpop.f32.mrf.mxu0
    %1396 = vdwg.mxu0
    %1397 = vmatpush.bf16.msra.mxu0 %v1040
    %1398 = vmatpush.bf16.msra.mxu0 %v1036
    %1399 = vmatpush.bf16.msra.mxu0 %v1032
    %1400 = vmatpush.bf16.msra.mxu0 %v1028
    %1401 = vmatpush.bf16.msra.mxu0 %v1024
    %1402 = vmatpush.bf16.msra.mxu0 %v1020
    %1403 = vmatpush.bf16.msra.mxu0 %v1016
    %1404 = vmatpush.bf16.msra.mxu0 %v1012
    %1405 = vmatmul.bf16.gmra.mxu0 %v103
    %v1406 = vpop.f32.mrf.mxu0
    %v1407 = vadd.f32 %v1394, %v1406
    %v1408 = vpop.f32.mrf.mxu0
    %1409 = vdwg.mxu0
    %1410 = vmatpush.bf16.msra.mxu0 %v1072
    %1411 = vmatpush.bf16.msra.mxu0 %v1068
    %1412 = vmatpush.bf16.msra.mxu0 %v1064
    %1413 = vmatpush.bf16.msra.mxu0 %v1060
    %1414 = vmatpush.bf16.msra.mxu0 %v1056
    %1415 = vmatpush.bf16.msra.mxu0 %v1052
    %1416 = vmatpush.bf16.msra.mxu0 %v1048
    %1417 = vmatpush.bf16.msra.mxu0 %v1044
    %1418 = vmatmul.bf16.gmra.mxu0 %v104
    %v1419 = vpop.f32.mrf.mxu0
    %v1420 = vadd.f32 %v1407, %v1419
    %v1421 = vpop.f32.mrf.mxu0
    %1422 = vdwg.mxu0
    %1423 = vmatpush.bf16.msra.mxu0 %v913
    %1424 = vmatpush.bf16.msra.mxu0 %v909
    %1425 = vmatpush.bf16.msra.mxu0 %v905
    %1426 = vmatpush.bf16.msra.mxu0 %v901
    %1427 = vmatpush.bf16.msra.mxu0 %v897
    %1428 = vmatpush.bf16.msra.mxu0 %v893
    %1429 = vmatpush.bf16.msra.mxu0 %v889
    %1430 = vmatpush.bf16.msra.mxu0 %v885
    %1431 = vmatmul.bf16.gmra.mxu0 %v99
    %v1432 = vpop.f32.mrf.mxu0
    %v1433 = vadd.f32 %v301, %v1432
    %v1434 = vpop.f32.mrf.mxu0
    %1435 = vdwg.mxu0
    %1436 = vmatpush.bf16.msra.mxu0 %v945
    %1437 = vmatpush.bf16.msra.mxu0 %v941
    %1438 = vmatpush.bf16.msra.mxu0 %v937
    %1439 = vmatpush.bf16.msra.mxu0 %v933
    %1440 = vmatpush.bf16.msra.mxu0 %v929
    %1441 = vmatpush.bf16.msra.mxu0 %v925
    %1442 = vmatpush.bf16.msra.mxu0 %v921
    %1443 = vmatpush.bf16.msra.mxu0 %v917
    %1444 = vmatmul.bf16.gmra.mxu0 %v100
    %v1445 = vpop.f32.mrf.mxu0
    %v1446 = vadd.f32 %v1433, %v1445
    %v1447 = vpop.f32.mrf.mxu0
    %1448 = vdwg.mxu0
    %1449 = vmatpush.bf16.msra.mxu0 %v977
    %1450 = vmatpush.bf16.msra.mxu0 %v973
    %1451 = vmatpush.bf16.msra.mxu0 %v969
    %1452 = vmatpush.bf16.msra.mxu0 %v965
    %1453 = vmatpush.bf16.msra.mxu0 %v961
    %1454 = vmatpush.bf16.msra.mxu0 %v957
    %1455 = vmatpush.bf16.msra.mxu0 %v953
    %1456 = vmatpush.bf16.msra.mxu0 %v949
    %1457 = vmatmul.bf16.gmra.mxu0 %v101
    %v1458 = vpop.f32.mrf.mxu0
    %v1459 = vadd.f32 %v1446, %v1458
    %v1460 = vpop.f32.mrf.mxu0
    %1461 = vdwg.mxu0
    %1462 = vmatpush.bf16.msra.mxu0 %v1009
    %1463 = vmatpush.bf16.msra.mxu0 %v1005
    %1464 = vmatpush.bf16.msra.mxu0 %v1001
    %1465 = vmatpush.bf16.msra.mxu0 %v997
    %1466 = vmatpush.bf16.msra.mxu0 %v993
    %1467 = vmatpush.bf16.msra.mxu0 %v989
    %1468 = vmatpush.bf16.msra.mxu0 %v985
    %1469 = vmatpush.bf16.msra.mxu0 %v981
    %1470 = vmatmul.bf16.gmra.mxu0 %v102
    %v1471 = vpop.f32.mrf.mxu0
    %v1472 = vadd.f32 %v1459, %v1471
    %v1473 = vpop.f32.mrf.mxu0
    %1474 = vdwg.mxu0
    %1475 = vmatpush.bf16.msra.mxu0 %v1041
    %1476 = vmatpush.bf16.msra.mxu0 %v1037
    %1477 = vmatpush.bf16.msra.mxu0 %v1033
    %1478 = vmatpush.bf16.msra.mxu0 %v1029
    %1479 = vmatpush.bf16.msra.mxu0 %v1025
    %1480 = vmatpush.bf16.msra.mxu0 %v1021
    %1481 = vmatpush.bf16.msra.mxu0 %v1017
    %1482 = vmatpush.bf16.msra.mxu0 %v1013
    %1483 = vmatmul.bf16.gmra.mxu0 %v103
    %v1484 = vpop.f32.mrf.mxu0
    %v1485 = vadd.f32 %v1472, %v1484
    %v1486 = vpop.f32.mrf.mxu0
    %1487 = vdwg.mxu0
    %1488 = vmatpush.bf16.msra.mxu0 %v1073
    %1489 = vmatpush.bf16.msra.mxu0 %v1069
    %1490 = vmatpush.bf16.msra.mxu0 %v1065
    %1491 = vmatpush.bf16.msra.mxu0 %v1061
    %1492 = vmatpush.bf16.msra.mxu0 %v1057
    %1493 = vmatpush.bf16.msra.mxu0 %v1053
    %1494 = vmatpush.bf16.msra.mxu0 %v1049
    %1495 = vmatpush.bf16.msra.mxu0 %v1045
    %1496 = vmatmul.bf16.gmra.mxu0 %v104
    %v1497 = vpop.f32.mrf.mxu0
    %v1498 = vadd.f32 %v1485, %v1497
    %v1499 = vpop.f32.mrf.mxu0
    %1500 = vdwg.mxu0
    %1501 = vmatpush.bf16.msra.mxu0 %v914
    %1502 = vmatpush.bf16.msra.mxu0 %v910
    %1503 = vmatpush.bf16.msra.mxu0 %v906
    %1504 = vmatpush.bf16.msra.mxu0 %v902
    %1505 = vmatpush.bf16.msra.mxu0 %v898
    %1506 = vmatpush.bf16.msra.mxu0 %v894
    %1507 = vmatpush.bf16.msra.mxu0 %v890
    %1508 = vmatpush.bf16.msra.mxu0 %v886
    %1509 = vmatmul.bf16.gmra.mxu0 %v99
    %v1510 = vpop.f32.mrf.mxu0
    %v1511 = vadd.f32 %v302, %v1510
    %v1512 = vpop.f32.mrf.mxu0
    %1513 = vdwg.mxu0
    %1514 = vmatpush.bf16.msra.mxu0 %v946
    %1515 = vmatpush.bf16.msra.mxu0 %v942
    %1516 = vmatpush.bf16.msra.mxu0 %v938
    %1517 = vmatpush.bf16.msra.mxu0 %v934
    %1518 = vmatpush.bf16.msra.mxu0 %v930
    %1519 = vmatpush.bf16.msra.mxu0 %v926
    %1520 = vmatpush.bf16.msra.mxu0 %v922
    %1521 = vmatpush.bf16.msra.mxu0 %v918
    %1522 = vmatmul.bf16.gmra.mxu0 %v100
    %v1523 = vpop.f32.mrf.mxu0
    %v1524 = vadd.f32 %v1511, %v1523
    %v1525 = vpop.f32.mrf.mxu0
    %1526 = vdwg.mxu0
    %1527 = vmatpush.bf16.msra.mxu0 %v978
    %1528 = vmatpush.bf16.msra.mxu0 %v974
    %1529 = vmatpush.bf16.msra.mxu0 %v970
    %1530 = vmatpush.bf16.msra.mxu0 %v966
    %1531 = vmatpush.bf16.msra.mxu0 %v962
    %1532 = vmatpush.bf16.msra.mxu0 %v958
    %1533 = vmatpush.bf16.msra.mxu0 %v954
    %1534 = vmatpush.bf16.msra.mxu0 %v950
    %1535 = vmatmul.bf16.gmra.mxu0 %v101
    %v1536 = vpop.f32.mrf.mxu0
    %v1537 = vadd.f32 %v1524, %v1536
    %v1538 = vpop.f32.mrf.mxu0
    %1539 = vdwg.mxu0
    %1540 = vmatpush.bf16.msra.mxu0 %v1010
    %1541 = vmatpush.bf16.msra.mxu0 %v1006
    %1542 = vmatpush.bf16.msra.mxu0 %v1002
    %1543 = vmatpush.bf16.msra.mxu0 %v998
    %1544 = vmatpush.bf16.msra.mxu0 %v994
    %1545 = vmatpush.bf16.msra.mxu0 %v990
    %1546 = vmatpush.bf16.msra.mxu0 %v986
    %1547 = vmatpush.bf16.msra.mxu0 %v982
    %1548 = vmatmul.bf16.gmra.mxu0 %v102
    %v1549 = vpop.f32.mrf.mxu0
    %v1550 = vadd.f32 %v1537, %v1549
    %v1551 = vpop.f32.mrf.mxu0
    %1552 = vdwg.mxu0
    %1553 = vmatpush.bf16.msra.mxu0 %v1042
    %1554 = vmatpush.bf16.msra.mxu0 %v1038
    %1555 = vmatpush.bf16.msra.mxu0 %v1034
    %1556 = vmatpush.bf16.msra.mxu0 %v1030
    %1557 = vmatpush.bf16.msra.mxu0 %v1026
    %1558 = vmatpush.bf16.msra.mxu0 %v1022
    %1559 = vmatpush.bf16.msra.mxu0 %v1018
    %1560 = vmatpush.bf16.msra.mxu0 %v1014
    %1561 = vmatmul.bf16.gmra.mxu0 %v103
    %v1562 = vpop.f32.mrf.mxu0
    %v1563 = vadd.f32 %v1550, %v1562
    %v1564 = vpop.f32.mrf.mxu0
    %1565 = vdwg.mxu0
    %1566 = vmatpush.bf16.msra.mxu0 %v1074
    %1567 = vmatpush.bf16.msra.mxu0 %v1070
    %1568 = vmatpush.bf16.msra.mxu0 %v1066
    %1569 = vmatpush.bf16.msra.mxu0 %v1062
    %1570 = vmatpush.bf16.msra.mxu0 %v1058
    %1571 = vmatpush.bf16.msra.mxu0 %v1054
    %1572 = vmatpush.bf16.msra.mxu0 %v1050
    %1573 = vmatpush.bf16.msra.mxu0 %v1046
    %1574 = vmatmul.bf16.gmra.mxu0 %v104
    %v1575 = vpop.f32.mrf.mxu0
    %v1576 = vadd.f32 %v1563, %v1575
    %v1577 = vpop.f32.mrf.mxu0
    %1578 = vdwg.mxu0
    %v1579 = vmax.f32 %v1342, 0.0
    %v1580 = vmax.f32 %v1420, 0.0
    %v1581 = vmax.f32 %v1498, 0.0
    %v1582 = vmax.f32 %v1576, 0.0
    %v1583 = vpack.c.bf16 %v1579, %v1579
    %v1584 = vpack.c.bf16 %v1580, %v1580
    %v1585 = vpack.c.bf16 %v1581, %v1581
    %v1586 = vpack.c.bf16 %v1582, %v1582
    %v1587 = vld [vmem:[#allocation8] sm:$0xf]
    %v1588 = vld [vmem:[#allocation8 + $0x4] sm:$0xf]
    %v1589 = vld [vmem:[#allocation8 + $0x8] sm:$0xf]
    %v1590 = vld [vmem:[#allocation8 + $0xc] sm:$0xf]
    %v1591 = vld [vmem:[#allocation8 + $0x10] sm:$0xf]
    %v1592 = vld [vmem:[#allocation8 + $0x14] sm:$0xf]
    %v1593 = vld [vmem:[#allocation8 + $0x18] sm:$0xf]
    %v1594 = vld [vmem:[#allocation8 + $0x1c] sm:$0xf]
    %v1595 = vld [vmem:[#allocation8 + $0x20] sm:$0xf]
    %v1596 = vld [vmem:[#allocation8 + $0x24] sm:$0xf]
    %v1597 = vld [vmem:[#allocation8 + $0x28] sm:$0xf]
    %v1598 = vld [vmem:[#allocation8 + $0x2c] sm:$0xf]
    %v1599 = vld [vmem:[#allocation8 + $0x30] sm:$0xf]
    %v1600 = vld [vmem:[#allocation8 + $0x34] sm:$0xf]
    %v1601 = vld [vmem:[#allocation8 + $0x38] sm:$0xf]
    %v1602 = vld [vmem:[#allocation8 + $0x3c] sm:$0xf]
    %v1603 = vld [vmem:[#allocation8 + $0x40] sm:$0xf]
    %v1604 = vld [vmem:[#allocation8 + $0x44] sm:$0xf]
    %v1605 = vld [vmem:[#allocation8 + $0x48] sm:$0xf]
    %v1606 = vld [vmem:[#allocation8 + $0x4c] sm:$0xf]
    %v1607 = vld [vmem:[#allocation8 + $0x50] sm:$0xf]
    %v1608 = vld [vmem:[#allocation8 + $0x54] sm:$0xf]
    %v1609 = vld [vmem:[#allocation8 + $0x58] sm:$0xf]
    %v1610 = vld [vmem:[#allocation8 + $0x5c] sm:$0xf]
    %v1611 = vld [vmem:[#allocation8 + $0x60] sm:$0xf]
    %v1612 = vld [vmem:[#allocation8 + $0x64] sm:$0xf]
    %v1613 = vld [vmem:[#allocation8 + $0x68] sm:$0xf]
    %v1614 = vld [vmem:[#allocation8 + $0x6c] sm:$0xf]
    %v1615 = vld [vmem:[#allocation8 + $0x70] sm:$0xf]
    %v1616 = vld [vmem:[#allocation8 + $0x74] sm:$0xf]
    %v1617 = vld [vmem:[#allocation8 + $0x78] sm:$0xf]
    %v1618 = vld [vmem:[#allocation8 + $0x7c] sm:$0xf]
    %v1619 = vld [vmem:[#allocation8 + $0x80] sm:$0xf]
    %v1620 = vld [vmem:[#allocation8 + $0x84] sm:$0xf]
    %v1621 = vld [vmem:[#allocation8 + $0x88] sm:$0xf]
    %v1622 = vld [vmem:[#allocation8 + $0x8c] sm:$0xf]
    %v1623 = vld [vmem:[#allocation8 + $0x90] sm:$0xf]
    %v1624 = vld [vmem:[#allocation8 + $0x94] sm:$0xf]
    %v1625 = vld [vmem:[#allocation8 + $0x98] sm:$0xf]
    %v1626 = vld [vmem:[#allocation8 + $0x9c] sm:$0xf]
    %v1627 = vld [vmem:[#allocation8 + $0xa0] sm:$0xf]
    %v1628 = vld [vmem:[#allocation8 + $0xa4] sm:$0xf]
    %v1629 = vld [vmem:[#allocation8 + $0xa8] sm:$0xf]
    %v1630 = vld [vmem:[#allocation8 + $0xac] sm:$0xf]
    %v1631 = vld [vmem:[#allocation8 + $0xb0] sm:$0xf]
    %v1632 = vld [vmem:[#allocation8 + $0xb4] sm:$0xf]
    %v1633 = vld [vmem:[#allocation8 + $0xb8] sm:$0xf]
    %v1634 = vld [vmem:[#allocation8 + $0xbc] sm:$0xf]
    %v1635 = vld [vmem:[#allocation8 + $0xc0] sm:$0xf]
    %v1636 = vld [vmem:[#allocation8 + $0xc4] sm:$0xf]
    %v1637 = vld [vmem:[#allocation8 + $0xc8] sm:$0xf]
    %v1638 = vld [vmem:[#allocation8 + $0xcc] sm:$0xf]
    %v1639 = vld [vmem:[#allocation8 + $0xd0] sm:$0xf]
    %v1640 = vld [vmem:[#allocation8 + $0xd4] sm:$0xf]
    %v1641 = vld [vmem:[#allocation8 + $0xd8] sm:$0xf]
    %v1642 = vld [vmem:[#allocation8 + $0xdc] sm:$0xf]
    %v1643 = vld [vmem:[#allocation8 + $0xe0] sm:$0xf]
    %v1644 = vld [vmem:[#allocation8 + $0xe4] sm:$0xf]
    %v1645 = vld [vmem:[#allocation8 + $0xe8] sm:$0xf]
    %v1646 = vld [vmem:[#allocation8 + $0xec] sm:$0xf]
    %v1647 = vld [vmem:[#allocation8 + $0xf0] sm:$0xf]
    %v1648 = vld [vmem:[#allocation8 + $0xf4] sm:$0xf]
    %v1649 = vld [vmem:[#allocation8 + $0xf8] sm:$0xf]
    %v1650 = vld [vmem:[#allocation8 + $0xfc] sm:$0xf]
    %v1651 = vld [vmem:[%s4] sm:$0x1]
    %v1653 = vperm.slane %v1651, 0
    %v1719 = vunpack.c.l.b16 %v1587
    %v1720 = vunpack.c.l.b16 %v1588
    %v1721 = vunpack.c.l.b16 %v1589
    %v1722 = vunpack.c.l.b16 %v1590
    %v1723 = vunpack.c.l.b16 %v1591
    %v1724 = vunpack.c.l.b16 %v1592
    %v1725 = vunpack.c.l.b16 %v1593
    %v1726 = vunpack.c.l.b16 %v1594
    %v1727 = vunpack.c.l.b16 %v1595
    %v1728 = vunpack.c.l.b16 %v1596
    %v1729 = vunpack.c.l.b16 %v1597
    %v1730 = vunpack.c.l.b16 %v1598
    %v1731 = vunpack.c.l.b16 %v1599
    %v1732 = vunpack.c.l.b16 %v1600
    %v1733 = vunpack.c.l.b16 %v1601
    %v1734 = vunpack.c.l.b16 %v1602
    %v1735 = vunpack.c.l.b16 %v1603
    %v1736 = vunpack.c.l.b16 %v1604
    %v1737 = vunpack.c.l.b16 %v1605
    %v1738 = vunpack.c.l.b16 %v1606
    %v1739 = vunpack.c.l.b16 %v1607
    %v1740 = vunpack.c.l.b16 %v1608
    %v1741 = vunpack.c.l.b16 %v1609
    %v1742 = vunpack.c.l.b16 %v1610
    %v1743 = vunpack.c.l.b16 %v1611
    %v1744 = vunpack.c.l.b16 %v1612
    %v1745 = vunpack.c.l.b16 %v1613
    %v1746 = vunpack.c.l.b16 %v1614
    %v1747 = vunpack.c.l.b16 %v1615
    %v1748 = vunpack.c.l.b16 %v1616
    %v1749 = vunpack.c.l.b16 %v1617
    %v1750 = vunpack.c.l.b16 %v1618
    %v1751 = vunpack.c.l.b16 %v1619
    %v1752 = vunpack.c.l.b16 %v1620
    %v1753 = vunpack.c.l.b16 %v1621
    %v1754 = vunpack.c.l.b16 %v1622
    %v1755 = vunpack.c.l.b16 %v1623
    %v1756 = vunpack.c.l.b16 %v1624
    %v1757 = vunpack.c.l.b16 %v1625
    %v1758 = vunpack.c.l.b16 %v1626
    %v1759 = vunpack.c.l.b16 %v1627
    %v1760 = vunpack.c.l.b16 %v1628
    %v1761 = vunpack.c.l.b16 %v1629
    %v1762 = vunpack.c.l.b16 %v1630
    %v1763 = vunpack.c.l.b16 %v1631
    %v1764 = vunpack.c.l.b16 %v1632
    %v1765 = vunpack.c.l.b16 %v1633
    %v1766 = vunpack.c.l.b16 %v1634
    %v1767 = vunpack.c.l.b16 %v1635
    %v1768 = vunpack.c.l.b16 %v1636
    %v1769 = vunpack.c.l.b16 %v1637
    %v1770 = vunpack.c.l.b16 %v1638
    %v1771 = vunpack.c.l.b16 %v1639
    %v1772 = vunpack.c.l.b16 %v1640
    %v1773 = vunpack.c.l.b16 %v1641
    %v1774 = vunpack.c.l.b16 %v1642
    %v1775 = vunpack.c.l.b16 %v1643
    %v1776 = vunpack.c.l.b16 %v1644
    %v1777 = vunpack.c.l.b16 %v1645
    %v1778 = vunpack.c.l.b16 %v1646
    %v1779 = vunpack.c.l.b16 %v1647
    %v1780 = vunpack.c.l.b16 %v1648
    %v1781 = vunpack.c.l.b16 %v1649
    %v1782 = vunpack.c.l.b16 %v1650
    %v1783 = vpack.c.b16 %v1720, %v1719
    %v1784 = vpack.c.b16 %v1722, %v1721
    %v1785 = vpack.c.b16 %v1724, %v1723
    %v1786 = vpack.c.b16 %v1726, %v1725
    %v1787 = vpack.c.b16 %v1728, %v1727
    %v1788 = vpack.c.b16 %v1730, %v1729
    %v1789 = vpack.c.b16 %v1732, %v1731
    %v1790 = vpack.c.b16 %v1734, %v1733
    %v1791 = vpack.c.b16 %v1736, %v1735
    %v1792 = vpack.c.b16 %v1738, %v1737
    %v1793 = vpack.c.b16 %v1740, %v1739
    %v1794 = vpack.c.b16 %v1742, %v1741
    %v1795 = vpack.c.b16 %v1744, %v1743
    %v1796 = vpack.c.b16 %v1746, %v1745
    %v1797 = vpack.c.b16 %v1748, %v1747
    %v1798 = vpack.c.b16 %v1750, %v1749
    %v1799 = vpack.c.b16 %v1752, %v1751
    %v1800 = vpack.c.b16 %v1754, %v1753
    %v1801 = vpack.c.b16 %v1756, %v1755
    %v1802 = vpack.c.b16 %v1758, %v1757
    %v1803 = vpack.c.b16 %v1760, %v1759
    %v1804 = vpack.c.b16 %v1762, %v1761
    %v1805 = vpack.c.b16 %v1764, %v1763
    %v1806 = vpack.c.b16 %v1766, %v1765
    %v1807 = vpack.c.b16 %v1768, %v1767
    %v1808 = vpack.c.b16 %v1770, %v1769
    %v1809 = vpack.c.b16 %v1772, %v1771
    %v1810 = vpack.c.b16 %v1774, %v1773
    %v1811 = vpack.c.b16 %v1776, %v1775
    %v1812 = vpack.c.b16 %v1778, %v1777
    %v1813 = vpack.c.b16 %v1780, %v1779
    %v1814 = vpack.c.b16 %v1782, %v1781
    %1847 = vmatpush.bf16.msra.mxu0 %v1790
    %1848 = vmatpush.bf16.msra.mxu0 %v1789
    %1849 = vmatpush.bf16.msra.mxu0 %v1788
    %1850 = vmatpush.bf16.msra.mxu0 %v1787
    %1851 = vmatpush.bf16.msra.mxu0 %v1786
    %1852 = vmatpush.bf16.msra.mxu0 %v1785
    %1853 = vmatpush.bf16.msra.mxu0 %v1784
    %1854 = vmatpush.bf16.msra.mxu0 %v1783
    %1855 = vmatmul.bf16.gmra.mxu0 %v1583
    %v1856 = vpop.f32.mrf.mxu0
    %v1857 = vadd.f32 %v1653, %v1856
    %v1858 = vpop.f32.mrf.mxu0
    %1859 = vdwg.mxu0
    %1860 = vmatpush.bf16.msra.mxu0 %v1798
    %1861 = vmatpush.bf16.msra.mxu0 %v1797
    %1862 = vmatpush.bf16.msra.mxu0 %v1796
    %1863 = vmatpush.bf16.msra.mxu0 %v1795
    %1864 = vmatpush.bf16.msra.mxu0 %v1794
    %1865 = vmatpush.bf16.msra.mxu0 %v1793
    %1866 = vmatpush.bf16.msra.mxu0 %v1792
    %1867 = vmatpush.bf16.msra.mxu0 %v1791
    %1868 = vmatmul.bf16.gmra.mxu0 %v1584
    %v1869 = vpop.f32.mrf.mxu0
    %v1870 = vadd.f32 %v1857, %v1869
    %v1871 = vpop.f32.mrf.mxu0
    %1872 = vdwg.mxu0
    %1873 = vmatpush.bf16.msra.mxu0 %v1806
    %1874 = vmatpush.bf16.msra.mxu0 %v1805
    %1875 = vmatpush.bf16.msra.mxu0 %v1804
    %1876 = vmatpush.bf16.msra.mxu0 %v1803
    %1877 = vmatpush.bf16.msra.mxu0 %v1802
    %1878 = vmatpush.bf16.msra.mxu0 %v1801
    %1879 = vmatpush.bf16.msra.mxu0 %v1800
    %1880 = vmatpush.bf16.msra.mxu0 %v1799
    %1881 = vmatmul.bf16.gmra.mxu0 %v1585
    %v1882 = vpop.f32.mrf.mxu0
    %v1883 = vadd.f32 %v1870, %v1882
    %v1884 = vpop.f32.mrf.mxu0
    %1885 = vdwg.mxu0
    %1886 = vmatpush.bf16.msra.mxu0 %v1814
    %1887 = vmatpush.bf16.msra.mxu0 %v1813
    %1888 = vmatpush.bf16.msra.mxu0 %v1812
    %1889 = vmatpush.bf16.msra.mxu0 %v1811
    %1890 = vmatpush.bf16.msra.mxu0 %v1810
    %1891 = vmatpush.bf16.msra.mxu0 %v1809
    %1892 = vmatpush.bf16.msra.mxu0 %v1808
    %1893 = vmatpush.bf16.msra.mxu0 %v1807
    %1894 = vmatmul.bf16.gmra.mxu0 %v1586
    %v1895 = vpop.f32.mrf.mxu0
    %v1896 = vadd.f32 %v1883, %v1895
    %v1897 = vpop.f32.mrf.mxu0
    %1898 = vdwg.mxu0
    %vm1899 = vcmask 1041408
    %v1900 = vsel %vm1899, %v1896, -inf
    %1901 = vmax.xlane.f32.xlu0 %v1900
    %v1902 = vpop.xlane.xlu0 %1901
    %v1903 = vsub.f32 %v1896, %v1902
    %v1904 = vmul.f32 %v1903, 1.442695
    %v1905 = vpow.pop %v1904
    %v1906 = vsel %vm1899, %v1905, 0.0
    %1907 = vadd.xlane.f32.xlu0 %v1906
    %v1908 = vpop.xlane.xlu0 %1907
    %v1909 = vlog2.pop %v1908
    %v1910 = vmul.f32 %v1909, 0.6931472
    %v1911 = vsub.f32 %v1903, %v1910
    %v1912 = vpack.c.bf16 %v1911, %v1911
    %1913 = vst [vmem:[#allocation10] sm:$0x1] %v1912
    // Predicated region
    $region38: #{tpu_custom_call.1} parent=1 // pred_check
      _
    $region39: #{tpu_custom_call.1} parent=1 // pred_check_branch
      %1915 = sbr.rel (0) target = $region41
    $region40: #{tpu_custom_call.1} parent=1 // pred_region
      %1917 = vsyncadd [#allocation4], 0
      %s1919 = sshll.u32 [#allocation10], 4
      %s1920 = int_to_ptr.vmem [resolvable:$true] %s1919
      %s1921 = sshll.u32 %s5, 4
      %s1922 = int_to_ptr.hbm [resolvable:$true] %s1921
      %1924 = dma.vmem_to_hbm [thread:$0]  %s1920, 16, %s1922, [#allocation4]
    $region41: #{tpu_custom_call.1} parent=1 // pred_fallthru
      _
    // Predicated region
    $region42: #{tpu_custom_call.1} parent=1 // pred_check
      _
    $region43: #{tpu_custom_call.1} parent=1 // pred_check_branch
      %1926 = sbr.rel (0) target = $region45
    $region44: #{tpu_custom_call.1} parent=1 // pred_region
      %1928 = dma.done [#allocation4], 16
    $region45: #{tpu_custom_call.1} parent=1 // pred_fallthru
      _
    %1929 = vsyncpa [#allocation3], 1
    %1930 = vsyncpa [#allocation6], 1
    %1931 = vsyncpa [#allocation9], 1
    %1932 = vsyncpa [#allocation4], 1

</llo_original>
